<compile_context>
chip_gen: v5e
topology: v5e:2x2
jax: 0.10.0
libtpu: 0.0.40
codegen_flags: <defaults>
</compile_context>

<pallas_src>
import functools
import math

import jax
import jax.numpy as jnp
import numpy as np
from jax.experimental import pallas as pl
from jax.experimental.pallas import tpu as pltpu

# ------------------------------- config -------------------------------------
VOCAB = 100
TYPE_VOCAB = 2
MAX_POS = 64
HIDDEN = 32
NUM_HEADS = 2
HEAD_DIM = HIDDEN // NUM_HEADS
INTERMEDIATE = 64
NUM_LAYERS = 2
LN_EPS = 1e-12

_SMEM = pltpu.MemorySpace.SMEM


def _gelu(x):
    # TODO(synk): torch.nn.functional.gelu defaults to the exact erf GELU; the
    # Mosaic-friendly tanh approximation is used here (max abs dev ~1e-3,
    # within the 1e-2 test tolerance).
    c = 0.7978845608028654  # sqrt(2/pi)
    return 0.5 * x * (1.0 + jnp.tanh(c * (x + 0.044715 * x * x * x)))


def _ln(x, g, b):
    mu = jnp.mean(x, axis=-1, keepdims=True)
    var = jnp.mean(jnp.square(x - mu), axis=-1, keepdims=True)
    return (x - mu) * jax.lax.rsqrt(var + LN_EPS) * g + b


# --------------------------- fused Pallas kernel -----------------------------
def _mrc_fused_kernel(emb_ref, mask_ref,
                      emb_ln_g_ref, emb_ln_b_ref,
                      wqkv_ref, bqkv_ref, wo_ref, bo_ref,
                      ln1_g_ref, ln1_b_ref,
                      wi_ref, bi_ref, wf_ref, bf_ref,
                      ln2_g_ref, ln2_b_ref,
                      w_se_ref, b_se_ref,
                      w1a_ref, w1b_ref, b1_ref, w2_ref, b2_ref,
                      span_ref, se_ref):
    # One grid program handles one batch element; everything stays in VMEM.
    x = _ln(emb_ref[0], emb_ln_g_ref[...], emb_ln_b_ref[...])          # (S, H)

    # Additive attention bias built in-kernel from the padding mask; hoisted
    # out of the layer loop (broadcasts over query rows inside each layer).
    bias = (1.0 - mask_ref[0]) * -1e9                                   # (1, S)
    scale = 1.0 / math.sqrt(HEAD_DIM)

    for l in range(NUM_LAYERS):                       # static unrolled loop
        # Fused Q/K/V projection: one (S,H)x(H,3H) MXU pass + one bias add.
        qkv = jnp.dot(x, wqkv_ref[l],
                      preferred_element_type=jnp.float32) + bqkv_ref[l]  # (S, 3H)
        ctx_heads = []
        for h in range(NUM_HEADS):                    # in-kernel head split
            q = qkv[:, h * HEAD_DIM:(h + 1) * HEAD_DIM]
            k = qkv[:, HIDDEN + h * HEAD_DIM:HIDDEN + (h + 1) * HEAD_DIM]
            v = qkv[:, 2 * HIDDEN + h * HEAD_DIM:2 * HIDDEN + (h + 1) * HEAD_DIM]
            s = jnp.dot(q, k.T, preferred_element_type=jnp.float32) * scale + bias
            m = jnp.max(s, axis=-1, keepdims=True)
            p = jnp.exp(s - m)
            p = p * pl.reciprocal(jnp.sum(p, axis=-1, keepdims=True), approx=True)
            ctx_heads.append(jnp.dot(p, v, preferred_element_type=jnp.float32))
        ctx = jnp.concatenate(ctx_heads, axis=-1)                        # (S, H)

        attn_out = jnp.dot(ctx, wo_ref[l],
                           preferred_element_type=jnp.float32) + bo_ref[l]
        x = _ln(x + attn_out, ln1_g_ref[l], ln1_b_ref[l])

        ffn = _gelu(jnp.dot(x, wi_ref[l],
                            preferred_element_type=jnp.float32) + bi_ref[l])
        ffn = jnp.dot(ffn, wf_ref[l],
                      preferred_element_type=jnp.float32) + bf_ref[l]
        x = _ln(x + ffn, ln2_g_ref[l], ln2_b_ref[l])

    # start/end heads fused into a single (H, 2) projection.
    se_ref[0] = jnp.dot(x, w_se_ref[...],
                        preferred_element_type=jnp.float32) + b_se_ref[...]  # (S, 2)

    # span head: classifier1 is split into the part acting on the "start" copy
    # and the part acting on the "end" copy, so the (S, S, 2H) concat input is
    # never materialized.
    p_start = jnp.dot(x, w1a_ref[...], preferred_element_type=jnp.float32)   # (S, 2H)
    p_end = jnp.dot(x, w1b_ref[...], preferred_element_type=jnp.float32)     # (S, 2H)
    z = _gelu(p_start[:, None, :] + p_end[None, :, :] + b1_ref[...][None])   # (S, S, 2H)
    span_ref[0] = jnp.sum(z * w2_ref[...][None], axis=-1) + b2_ref[0, 0]     # (S, S)


def mrc_forward_pallas(params, input_ids, token_type_ids, attention_mask):
    bert = params["bert"]
    batch, seq = input_ids.shape

    # Embedding gathers are plain-JAX glue feeding the fused kernel.
    emb = (bert["word_emb"][input_ids]
           + bert["pos_emb"][jnp.arange(seq)][None]
           + bert["type_emb"][token_type_ids]).astype(jnp.float32)      # (B, S, H)
    mask = attention_mask.astype(jnp.float32).reshape(batch, 1, seq)    # (B, 1, S)

    layers = bert["layers"]

    def stack(name):
        return jnp.stack([lp[name] for lp in layers])

    # Pack per-layer weights into stacked arrays (static [l] indexing in-kernel).
    wqkv = jnp.stack([jnp.concatenate([lp["wq"], lp["wk"], lp["wv"]], axis=1)
                      for lp in layers])                                 # (L, H, 3H)
    bqkv = jnp.stack([jnp.concatenate([lp["bq"], lp["bk"], lp["bv"]])[None]
                      for lp in layers])                                 # (L, 1, 3H)
    wo = stack("wo")                                                     # (L, H, H)
    bo = stack("bo")[:, None, :]                                         # (L, 1, H)
    ln1_g = stack("ln1_g")[:, None, :]
    ln1_b = stack("ln1_b")[:, None, :]
    wi = stack("wi")                                                     # (L, H, I)
    bi = stack("bi")[:, None, :]
    wf = stack("wf")                                                     # (L, I, H)
    bf = stack("bf")[:, None, :]
    ln2_g = stack("ln2_g")[:, None, :]
    ln2_b = stack("ln2_b")[:, None, :]

    emb_ln_g = bert["emb_ln_g"].reshape(1, HIDDEN)
    emb_ln_b = bert["emb_ln_b"].reshape(1, HIDDEN)

    # start/end heads fused: (H, 2) weight, (1, 2) bias.
    w_se = jnp.concatenate([params["w_start"], params["w_end"]], axis=1)  # (H, 2)
    b_se = jnp.concatenate([params["b_start"], params["b_end"]]).reshape(1, 2)

    two_h = 2 * HIDDEN
    w1a = params["span_w1"][:HIDDEN]            # rows acting on the "start" copy
    w1b = params["span_w1"][HIDDEN:]            # rows acting on the "end" copy
    b1 = params["span_b1"].reshape(1, two_h)
    w2 = params["span_w2"].reshape(1, two_h)
    b2 = params["span_b2"].reshape(1, 1)

    def vspec(shape):
        nd = len(shape)
        return pl.BlockSpec(shape, lambda b, _nd=nd: (0,) * _nd)

    span_logits, se_logits = pl.pallas_call(
        _mrc_fused_kernel,
        out_shape=(jax.ShapeDtypeStruct((batch, seq, seq), jnp.float32),
                   jax.ShapeDtypeStruct((batch, seq, 2), jnp.float32)),
        grid=(batch,),
        in_specs=[
            pl.BlockSpec((1, seq, HIDDEN), lambda b: (b, 0, 0)),         # emb
            pl.BlockSpec((1, 1, seq), lambda b: (b, 0, 0)),              # mask
            vspec(emb_ln_g.shape), vspec(emb_ln_b.shape),
            vspec(wqkv.shape), vspec(bqkv.shape),
            vspec(wo.shape), vspec(bo.shape),
            vspec(ln1_g.shape), vspec(ln1_b.shape),
            vspec(wi.shape), vspec(bi.shape),
            vspec(wf.shape), vspec(bf.shape),
            vspec(ln2_g.shape), vspec(ln2_b.shape),
            vspec(w_se.shape), vspec(b_se.shape),
            vspec(w1a.shape), vspec(w1b.shape), vspec(b1.shape), vspec(w2.shape),
            pl.BlockSpec((1, 1), lambda b: (0, 0), memory_space=_SMEM),  # b2 scalar
        ],
        out_specs=(pl.BlockSpec((1, seq, seq), lambda b: (b, 0, 0)),
                   pl.BlockSpec((1, seq, 2), lambda b: (b, 0, 0))),
        compiler_params=pltpu.CompilerParams(
            dimension_semantics=("parallel",)),
    )(emb, mask, emb_ln_g, emb_ln_b, wqkv, bqkv, wo, bo,
      ln1_g, ln1_b, wi, bi, wf, bf, ln2_g, ln2_b,
      w_se, b_se, w1a, w1b, b1, w2, b2)

    start_logits = se_logits[:, :, 0]
    end_logits = se_logits[:, :, 1]
    return start_logits, end_logits, span_logits


# --------------------------- pure-JAX reference -------------------------------
def ref_forward(params, input_ids, token_type_ids, attention_mask):
    bert = params["bert"]
    batch, seq = input_ids.shape
    emb = (bert["word_emb"][input_ids]
           + bert["pos_emb"][jnp.arange(seq)][None]
           + bert["type_emb"][token_type_ids])
    x = _ln(emb, bert["emb_ln_g"], bert["emb_ln_b"])
    bias = ((1.0 - attention_mask.astype(jnp.float32)) * -1e9)[:, None, None, :]
    scale = 1.0 / math.sqrt(HEAD_DIM)

    def split(t):
        return t.reshape(batch, seq, NUM_HEADS, HEAD_DIM).transpose(0, 2, 1, 3)

    for p in bert["layers"]:
        q = x @ p["wq"] + p["bq"]
        k = x @ p["wk"] + p["bk"]
        v = x @ p["wv"] + p["bv"]
        s = jnp.einsum("bhqd,bhkd->bhqk", split(q), split(k)) * scale + bias
        pr = jax.nn.softmax(s, axis=-1)
        ctx = jnp.einsum("bhqk,bhkd->bhqd", pr, split(v))
        ctx = ctx.transpose(0, 2, 1, 3).reshape(batch, seq, HIDDEN)
        x = _ln(x + ctx @ p["wo"] + p["bo"], p["ln1_g"], p["ln1_b"])
        ffn = _gelu(x @ p["wi"] + p["bi"]) @ p["wf"] + p["bf"]
        x = _ln(x + ffn, p["ln2_g"], p["ln2_b"])

    start_logits = (x @ params["w_start"] + params["b_start"])[..., 0]
    end_logits = (x @ params["w_end"] + params["b_end"])[..., 0]
    start_ext = jnp.broadcast_to(x[:, :, None, :], (batch, seq, seq, HIDDEN))
    end_ext = jnp.broadcast_to(x[:, None, :, :], (batch, seq, seq, HIDDEN))
    span = jnp.concatenate([start_ext, end_ext], axis=-1)     # [h_i ; h_j]
    z = _gelu(span @ params["span_w1"] + params["span_b1"])
    span_logits = (z @ params["span_w2"] + params["span_b2"])[..., 0]
    return start_logits, end_logits, span_logits


# ------------------------------ params ----------------------------------------
def init_params(key):
    keys = iter(jax.random.split(key, 128))

    def w(shape, scale=0.02):
        return (scale * jax.random.normal(next(keys), shape)).astype(jnp.float32)

    def ones(shape):
        return jnp.ones(shape, jnp.float32)

    layers = []
    for _ in range(NUM_LAYERS):
        layers.append(dict(
            wq=w((HIDDEN, HIDDEN)), bq=w((HIDDEN,)),
            wk=w((HIDDEN, HIDDEN)), bk=w((HIDDEN,)),
            wv=w((HIDDEN, HIDDEN)), bv=w((HIDDEN,)),
            wo=w((HIDDEN, HIDDEN)), bo=w((HIDDEN,)),
            ln1_g=ones((HIDDEN,)), ln1_b=w((HIDDEN,)),
            wi=w((HIDDEN, INTERMEDIATE)), bi=w((INTERMEDIATE,)),
            wf=w((INTERMEDIATE, HIDDEN)), bf=w((HIDDEN,)),
            ln2_g=ones((HIDDEN,)), ln2_b=w((HIDDEN,)),
        ))
    bert = dict(
        word_emb=w((VOCAB, HIDDEN)),
        pos_emb=w((MAX_POS, HIDDEN)),
        type_emb=w((TYPE_VOCAB, HIDDEN)),
        emb_ln_g=ones((HIDDEN,)), emb_ln_b=w((HIDDEN,)),
        layers=layers,
    )
    return dict(
        bert=bert,
        w_start=w((HIDDEN, 1)), b_start=w((1,)),
        w_end=w((HIDDEN, 1)), b_end=w((1,)),
        span_w1=w((2 * HIDDEN, 2 * HIDDEN)), span_b1=w((2 * HIDDEN,)),
        span_w2=w((2 * HIDDEN, 1)), span_b2=w((1,)),
    )


# ------------------------------ main -------------------------------------------
if __name__ == "__main__":
    key = jax.random.PRNGKey(0)
    pkey, ikey = jax.random.split(key)
    params = init_params(pkey)

    batch, seq = 2, 8
    input_ids = jax.random.randint(ikey, (batch, seq), 0, VOCAB, dtype=jnp.int32)
    token_type_ids = jnp.concatenate(
        [jnp.zeros((batch, seq // 2), jnp.int32),
         jnp.ones((batch, seq - seq // 2), jnp.int32)], axis=1)
    attention_mask = jnp.ones((batch, seq), jnp.int32).at[1, -2:].set(0)

    fwd = jax.jit(mrc_forward_pallas)
    start_logits, end_logits, span_logits = jax.block_until_ready(
        fwd(params, input_ids, token_type_ids, attention_mask))

    assert start_logits.shape == (batch, seq)
    assert end_logits.shape == (batch, seq)
    assert span_logits.shape == (batch, seq, seq)

    ref = ref_forward(params, input_ids, token_type_ids, attention_mask)
    np.testing.assert_allclose(np.asarray(start_logits), np.asarray(ref[0]),
                               rtol=1e-2, atol=1e-2)
    np.testing.assert_allclose(np.asarray(end_logits), np.asarray(ref[1]),
                               rtol=1e-2, atol=1e-2)
    np.testing.assert_allclose(np.asarray(span_logits), np.asarray(ref[2]),
                               rtol=1e-2, atol=1e-2)

    print("KERNEL_OK")
</pallas_src>

<mosaic_0001>
module attributes {stable_mosaic.version = 11 : i64} {
  func.func @_mrc_fused_kernel(%arg0: i32, %arg1: memref<1x8x32xf32, #tpu.memory_space<vmem>>, %arg2: memref<1x1x8xf32, #tpu.memory_space<vmem>>, %arg3: memref<1x32xf32, #tpu.memory_space<vmem>>, %arg4: memref<1x32xf32, #tpu.memory_space<vmem>>, %arg5: memref<2x32x96xf32, #tpu.memory_space<vmem>>, %arg6: memref<2x1x96xf32, #tpu.memory_space<vmem>>, %arg7: memref<2x32x32xf32, #tpu.memory_space<vmem>>, %arg8: memref<2x1x32xf32, #tpu.memory_space<vmem>>, %arg9: memref<2x1x32xf32, #tpu.memory_space<vmem>>, %arg10: memref<2x1x32xf32, #tpu.memory_space<vmem>>, %arg11: memref<2x32x64xf32, #tpu.memory_space<vmem>>, %arg12: memref<2x1x64xf32, #tpu.memory_space<vmem>>, %arg13: memref<2x64x32xf32, #tpu.memory_space<vmem>>, %arg14: memref<2x1x32xf32, #tpu.memory_space<vmem>>, %arg15: memref<2x1x32xf32, #tpu.memory_space<vmem>>, %arg16: memref<2x1x32xf32, #tpu.memory_space<vmem>>, %arg17: memref<32x2xf32, #tpu.memory_space<vmem>>, %arg18: memref<1x2xf32, #tpu.memory_space<vmem>>, %arg19: memref<32x64xf32, #tpu.memory_space<vmem>>, %arg20: memref<32x64xf32, #tpu.memory_space<vmem>>, %arg21: memref<1x64xf32, #tpu.memory_space<vmem>>, %arg22: memref<1x64xf32, #tpu.memory_space<vmem>>, %arg23: memref<1x1xf32, #tpu.memory_space<smem>>, %arg24: memref<1x8x8xf32, #tpu.memory_space<vmem>>, %arg25: memref<1x8x2xf32, #tpu.memory_space<vmem>>) attributes {dimension_semantics = [#tpu.dimension_semantics<parallel>], iteration_bounds = array<i64: 2>, scalar_prefetch = 0 : i64, scratch_operands = 0 : i64, tpu.core_type = #tpu.core_type<tc>, window_params = [{transform_indices = @transform_0, window_bounds = array<i64: 1, 8, 32>}, {transform_indices = @transform_1, window_bounds = array<i64: 1, 1, 8>}, {pipeline_mode = #tpu.pipeline_mode<synchronous>, transform_indices = @transform_2, window_bounds = array<i64: 1, 32>}, {pipeline_mode = #tpu.pipeline_mode<synchronous>, transform_indices = @transform_3, window_bounds = array<i64: 1, 32>}, {pipeline_mode = #tpu.pipeline_mode<synchronous>, transform_indices = @transform_4, window_bounds = array<i64: 2, 32, 96>}, {pipeline_mode = #tpu.pipeline_mode<synchronous>, transform_indices = @transform_5, window_bounds = array<i64: 2, 1, 96>}, {pipeline_mode = #tpu.pipeline_mode<synchronous>, transform_indices = @transform_6, window_bounds = array<i64: 2, 32, 32>}, {pipeline_mode = #tpu.pipeline_mode<synchronous>, transform_indices = @transform_7, window_bounds = array<i64: 2, 1, 32>}, {pipeline_mode = #tpu.pipeline_mode<synchronous>, transform_indices = @transform_8, window_bounds = array<i64: 2, 1, 32>}, {pipeline_mode = #tpu.pipeline_mode<synchronous>, transform_indices = @transform_9, window_bounds = array<i64: 2, 1, 32>}, {pipeline_mode = #tpu.pipeline_mode<synchronous>, transform_indices = @transform_10, window_bounds = array<i64: 2, 32, 64>}, {pipeline_mode = #tpu.pipeline_mode<synchronous>, transform_indices = @transform_11, window_bounds = array<i64: 2, 1, 64>}, {pipeline_mode = #tpu.pipeline_mode<synchronous>, transform_indices = @transform_12, window_bounds = array<i64: 2, 64, 32>}, {pipeline_mode = #tpu.pipeline_mode<synchronous>, transform_indices = @transform_13, window_bounds = array<i64: 2, 1, 32>}, {pipeline_mode = #tpu.pipeline_mode<synchronous>, transform_indices = @transform_14, window_bounds = array<i64: 2, 1, 32>}, {pipeline_mode = #tpu.pipeline_mode<synchronous>, transform_indices = @transform_15, window_bounds = array<i64: 2, 1, 32>}, {pipeline_mode = #tpu.pipeline_mode<synchronous>, transform_indices = @transform_16, window_bounds = array<i64: 32, 2>}, {pipeline_mode = #tpu.pipeline_mode<synchronous>, transform_indices = @transform_17, window_bounds = array<i64: 1, 2>}, {pipeline_mode = #tpu.pipeline_mode<synchronous>, transform_indices = @transform_18, window_bounds = array<i64: 32, 64>}, {pipeline_mode = #tpu.pipeline_mode<synchronous>, transform_indices = @transform_19, window_bounds = array<i64: 32, 64>}, {pipeline_mode = #tpu.pipeline_mode<synchronous>, transform_indices = @transform_20, window_bounds = array<i64: 1, 64>}, {pipeline_mode = #tpu.pipeline_mode<synchronous>, transform_indices = @transform_21, window_bounds = array<i64: 1, 64>}, {transform_indices = @transform_22, window_bounds = array<i64: 1, 1>}, {transform_indices = @transform_23, window_bounds = array<i64: 1, 8, 8>}, {transform_indices = @transform_24, window_bounds = array<i64: 1, 8, 2>}]} {
    %c0 = arith.constant 0 : index
    %c0_0 = arith.constant 0 : index
    %c0_1 = arith.constant 0 : index
    %0 = vector.load %arg1[%c0, %c0_0, %c0_1] : memref<1x8x32xf32, #tpu.memory_space<vmem>>, vector<1x8x32xf32>
    %1 = vector.shape_cast %0 : vector<1x8x32xf32> to vector<8x32xf32>
    %c0_2 = arith.constant 0 : index
    %c0_3 = arith.constant 0 : index
    %2 = vector.load %arg3[%c0_2, %c0_3] : memref<1x32xf32, #tpu.memory_space<vmem>>, vector<1x32xf32>
    %c0_4 = arith.constant 0 : index
    %c0_5 = arith.constant 0 : index
    %3 = vector.load %arg4[%c0_4, %c0_5] : memref<1x32xf32, #tpu.memory_space<vmem>>, vector<1x32xf32>
    %cst = arith.constant dense<0.000000e+00> : vector<8xf32>
    %4 = vector.multi_reduction <add>, %1, %cst [1] : vector<8x32xf32> to vector<8xf32>
    %5 = vector.shape_cast %4 : vector<8xf32> to vector<8x1xf32>
    %cst_6 = arith.constant 3.200000e+01 : f32
    %6 = vector.broadcast %cst_6 : f32 to vector<8x1xf32>
    %7 = arith.divf %5, %6 : vector<8x1xf32>
    %8 = vector.broadcast %7 : vector<8x1xf32> to vector<8x32xf32>
    %9 = arith.subf %1, %8 : vector<8x32xf32>
    %10 = arith.mulf %9, %9 : vector<8x32xf32>
    %cst_7 = arith.constant dense<0.000000e+00> : vector<8xf32>
    %11 = vector.multi_reduction <add>, %10, %cst_7 [1] : vector<8x32xf32> to vector<8xf32>
    %12 = vector.shape_cast %11 : vector<8xf32> to vector<8x1xf32>
    %cst_8 = arith.constant 3.200000e+01 : f32
    %13 = vector.broadcast %cst_8 : f32 to vector<8x1xf32>
    %14 = arith.divf %12, %13 : vector<8x1xf32>
    %15 = vector.broadcast %7 : vector<8x1xf32> to vector<8x32xf32>
    %16 = arith.subf %1, %15 : vector<8x32xf32>
    %cst_9 = arith.constant 9.99999996E-13 : f32
    %17 = vector.broadcast %cst_9 : f32 to vector<8x1xf32>
    %18 = arith.addf %14, %17 : vector<8x1xf32>
    %19 = math.rsqrt %18 : vector<8x1xf32>
    %20 = vector.broadcast %19 : vector<8x1xf32> to vector<8x32xf32>
    %21 = arith.mulf %16, %20 : vector<8x32xf32>
    %22 = vector.broadcast %2 : vector<1x32xf32> to vector<8x32xf32>
    %23 = arith.mulf %21, %22 : vector<8x32xf32>
    %24 = vector.broadcast %3 : vector<1x32xf32> to vector<8x32xf32>
    %25 = arith.addf %23, %24 : vector<8x32xf32>
    %c0_10 = arith.constant 0 : index
    %c0_11 = arith.constant 0 : index
    %c0_12 = arith.constant 0 : index
    %26 = vector.load %arg2[%c0_10, %c0_11, %c0_12] : memref<1x1x8xf32, #tpu.memory_space<vmem>>, vector<1x1x8xf32>
    %27 = vector.shape_cast %26 : vector<1x1x8xf32> to vector<1x8xf32>
    %cst_13 = arith.constant 1.000000e+00 : f32
    %28 = vector.broadcast %cst_13 : f32 to vector<1x8xf32>
    %29 = arith.subf %28, %27 : vector<1x8xf32>
    %cst_14 = arith.constant -1.000000e+09 : f32
    %30 = vector.broadcast %cst_14 : f32 to vector<1x8xf32>
    %31 = arith.mulf %29, %30 : vector<1x8xf32>
    %c0_15 = arith.constant 0 : index
    %c0_16 = arith.constant 0 : index
    %c0_17 = arith.constant 0 : index
    %32 = vector.load %arg5[%c0_15, %c0_16, %c0_17] : memref<2x32x96xf32, #tpu.memory_space<vmem>>, vector<1x32x96xf32>
    %33 = vector.shape_cast %32 : vector<1x32x96xf32> to vector<32x96xf32>
    %cst_18 = arith.constant dense<0.000000e+00> : vector<8x96xf32>
    %34 = tpu.matmul %25, %33, %cst_18 {dimension_numbers = #tpu.dot_dimension_numbers<[1], [0], [0], [1], [0, 0, 1, 1], [], []>} : vector<8x32xf32>, vector<32x96xf32>, vector<8x96xf32> -> vector<8x96xf32>
    %c0_19 = arith.constant 0 : index
    %c0_20 = arith.constant 0 : index
    %c0_21 = arith.constant 0 : index
    %35 = vector.load %arg6[%c0_19, %c0_20, %c0_21] : memref<2x1x96xf32, #tpu.memory_space<vmem>>, vector<1x1x96xf32>
    %36 = vector.shape_cast %35 : vector<1x1x96xf32> to vector<1x96xf32>
    %37 = vector.broadcast %36 : vector<1x96xf32> to vector<8x96xf32>
    %38 = arith.addf %34, %37 : vector<8x96xf32>
    %39 = vector.extract_strided_slice %38 {offsets = [0, 0], sizes = [8, 16], strides = [1, 1]} : vector<8x96xf32> to vector<8x16xf32>
    %40 = vector.extract_strided_slice %38 {offsets = [0, 32], sizes = [8, 16], strides = [1, 1]} : vector<8x96xf32> to vector<8x16xf32>
    %41 = vector.extract_strided_slice %38 {offsets = [0, 64], sizes = [8, 16], strides = [1, 1]} : vector<8x96xf32> to vector<8x16xf32>
    %42 = tpu.transpose %40, [1, 0] : vector<8x16xf32> -> vector<16x8xf32>
    %cst_22 = arith.constant dense<0.000000e+00> : vector<8x8xf32>
    %43 = tpu.matmul %39, %42, %cst_22 {dimension_numbers = #tpu.dot_dimension_numbers<[1], [0], [0], [1], [0, 0, 1, 1], [], []>} : vector<8x16xf32>, vector<16x8xf32>, vector<8x8xf32> -> vector<8x8xf32>
    %cst_23 = arith.constant 2.500000e-01 : f32
    %44 = vector.broadcast %cst_23 : f32 to vector<8x8xf32>
    %45 = arith.mulf %43, %44 : vector<8x8xf32>
    %46 = vector.broadcast %31 : vector<1x8xf32> to vector<8x8xf32>
    %47 = arith.addf %45, %46 : vector<8x8xf32>
    %cst_24 = arith.constant dense<0xFF800000> : vector<8xf32>
    %48 = vector.multi_reduction <maximumf>, %47, %cst_24 [1] : vector<8x8xf32> to vector<8xf32>
    %49 = vector.shape_cast %48 : vector<8xf32> to vector<8x1xf32>
    %50 = vector.broadcast %49 : vector<8x1xf32> to vector<8x8xf32>
    %51 = arith.subf %47, %50 : vector<8x8xf32>
    %52 = math.exp %51 : vector<8x8xf32>
    %cst_25 = arith.constant dense<0.000000e+00> : vector<8xf32>
    %53 = vector.multi_reduction <add>, %52, %cst_25 [1] : vector<8x8xf32> to vector<8xf32>
    %54 = vector.shape_cast %53 : vector<8xf32> to vector<8x1xf32>
    %55 = tpu.reciprocal %54 {approx = true} : vector<8x1xf32> -> vector<8x1xf32>
    %56 = vector.broadcast %55 : vector<8x1xf32> to vector<8x8xf32>
    %57 = arith.mulf %52, %56 : vector<8x8xf32>
    %cst_26 = arith.constant dense<0.000000e+00> : vector<8x16xf32>
    %58 = tpu.matmul %57, %41, %cst_26 {dimension_numbers = #tpu.dot_dimension_numbers<[1], [0], [0], [1], [0, 0, 1, 1], [], []>} : vector<8x8xf32>, vector<8x16xf32>, vector<8x16xf32> -> vector<8x16xf32>
    %59 = vector.extract_strided_slice %38 {offsets = [0, 16], sizes = [8, 16], strides = [1, 1]} : vector<8x96xf32> to vector<8x16xf32>
    %60 = vector.extract_strided_slice %38 {offsets = [0, 48], sizes = [8, 16], strides = [1, 1]} : vector<8x96xf32> to vector<8x16xf32>
    %61 = vector.extract_strided_slice %38 {offsets = [0, 80], sizes = [8, 16], strides = [1, 1]} : vector<8x96xf32> to vector<8x16xf32>
    %62 = tpu.transpose %60, [1, 0] : vector<8x16xf32> -> vector<16x8xf32>
    %cst_27 = arith.constant dense<0.000000e+00> : vector<8x8xf32>
    %63 = tpu.matmul %59, %62, %cst_27 {dimension_numbers = #tpu.dot_dimension_numbers<[1], [0], [0], [1], [0, 0, 1, 1], [], []>} : vector<8x16xf32>, vector<16x8xf32>, vector<8x8xf32> -> vector<8x8xf32>
    %cst_28 = arith.constant 2.500000e-01 : f32
    %64 = vector.broadcast %cst_28 : f32 to vector<8x8xf32>
    %65 = arith.mulf %63, %64 : vector<8x8xf32>
    %66 = vector.broadcast %31 : vector<1x8xf32> to vector<8x8xf32>
    %67 = arith.addf %65, %66 : vector<8x8xf32>
    %cst_29 = arith.constant dense<0xFF800000> : vector<8xf32>
    %68 = vector.multi_reduction <maximumf>, %67, %cst_29 [1] : vector<8x8xf32> to vector<8xf32>
    %69 = vector.shape_cast %68 : vector<8xf32> to vector<8x1xf32>
    %70 = vector.broadcast %69 : vector<8x1xf32> to vector<8x8xf32>
    %71 = arith.subf %67, %70 : vector<8x8xf32>
    %72 = math.exp %71 : vector<8x8xf32>
    %cst_30 = arith.constant dense<0.000000e+00> : vector<8xf32>
    %73 = vector.multi_reduction <add>, %72, %cst_30 [1] : vector<8x8xf32> to vector<8xf32>
    %74 = vector.shape_cast %73 : vector<8xf32> to vector<8x1xf32>
    %75 = tpu.reciprocal %74 {approx = true} : vector<8x1xf32> -> vector<8x1xf32>
    %76 = vector.broadcast %75 : vector<8x1xf32> to vector<8x8xf32>
    %77 = arith.mulf %72, %76 : vector<8x8xf32>
    %cst_31 = arith.constant dense<0.000000e+00> : vector<8x16xf32>
    %78 = tpu.matmul %77, %61, %cst_31 {dimension_numbers = #tpu.dot_dimension_numbers<[1], [0], [0], [1], [0, 0, 1, 1], [], []>} : vector<8x8xf32>, vector<8x16xf32>, vector<8x16xf32> -> vector<8x16xf32>
    %79 = tpu.concatenate %58, %78 in 1 : vector<8x16xf32>, vector<8x16xf32> -> vector<8x32xf32>
    %c0_32 = arith.constant 0 : index
    %c0_33 = arith.constant 0 : index
    %c0_34 = arith.constant 0 : index
    %80 = vector.load %arg7[%c0_32, %c0_33, %c0_34] : memref<2x32x32xf32, #tpu.memory_space<vmem>>, vector<1x32x32xf32>
    %81 = vector.shape_cast %80 : vector<1x32x32xf32> to vector<32x32xf32>
    %cst_35 = arith.constant dense<0.000000e+00> : vector<8x32xf32>
    %82 = tpu.matmul %79, %81, %cst_35 {dimension_numbers = #tpu.dot_dimension_numbers<[1], [0], [0], [1], [0, 0, 1, 1], [], []>} : vector<8x32xf32>, vector<32x32xf32>, vector<8x32xf32> -> vector<8x32xf32>
    %c0_36 = arith.constant 0 : index
    %c0_37 = arith.constant 0 : index
    %c0_38 = arith.constant 0 : index
    %83 = vector.load %arg8[%c0_36, %c0_37, %c0_38] : memref<2x1x32xf32, #tpu.memory_space<vmem>>, vector<1x1x32xf32>
    %84 = vector.shape_cast %83 : vector<1x1x32xf32> to vector<1x32xf32>
    %85 = vector.broadcast %84 : vector<1x32xf32> to vector<8x32xf32>
    %86 = arith.addf %82, %85 : vector<8x32xf32>
    %87 = arith.addf %25, %86 : vector<8x32xf32>
    %c0_39 = arith.constant 0 : index
    %c0_40 = arith.constant 0 : index
    %c0_41 = arith.constant 0 : index
    %88 = vector.load %arg9[%c0_39, %c0_40, %c0_41] : memref<2x1x32xf32, #tpu.memory_space<vmem>>, vector<1x1x32xf32>
    %89 = vector.shape_cast %88 : vector<1x1x32xf32> to vector<1x32xf32>
    %c0_42 = arith.constant 0 : index
    %c0_43 = arith.constant 0 : index
    %c0_44 = arith.constant 0 : index
    %90 = vector.load %arg10[%c0_42, %c0_43, %c0_44] : memref<2x1x32xf32, #tpu.memory_space<vmem>>, vector<1x1x32xf32>
    %91 = vector.shape_cast %90 : vector<1x1x32xf32> to vector<1x32xf32>
    %cst_45 = arith.constant dense<0.000000e+00> : vector<8xf32>
    %92 = vector.multi_reduction <add>, %87, %cst_45 [1] : vector<8x32xf32> to vector<8xf32>
    %93 = vector.shape_cast %92 : vector<8xf32> to vector<8x1xf32>
    %cst_46 = arith.constant 3.200000e+01 : f32
    %94 = vector.broadcast %cst_46 : f32 to vector<8x1xf32>
    %95 = arith.divf %93, %94 : vector<8x1xf32>
    %96 = vector.broadcast %95 : vector<8x1xf32> to vector<8x32xf32>
    %97 = arith.subf %87, %96 : vector<8x32xf32>
    %98 = arith.mulf %97, %97 : vector<8x32xf32>
    %cst_47 = arith.constant dense<0.000000e+00> : vector<8xf32>
    %99 = vector.multi_reduction <add>, %98, %cst_47 [1] : vector<8x32xf32> to vector<8xf32>
    %100 = vector.shape_cast %99 : vector<8xf32> to vector<8x1xf32>
    %cst_48 = arith.constant 3.200000e+01 : f32
    %101 = vector.broadcast %cst_48 : f32 to vector<8x1xf32>
    %102 = arith.divf %100, %101 : vector<8x1xf32>
    %103 = vector.broadcast %95 : vector<8x1xf32> to vector<8x32xf32>
    %104 = arith.subf %87, %103 : vector<8x32xf32>
    %cst_49 = arith.constant 9.99999996E-13 : f32
    %105 = vector.broadcast %cst_49 : f32 to vector<8x1xf32>
    %106 = arith.addf %102, %105 : vector<8x1xf32>
    %107 = math.rsqrt %106 : vector<8x1xf32>
    %108 = vector.broadcast %107 : vector<8x1xf32> to vector<8x32xf32>
    %109 = arith.mulf %104, %108 : vector<8x32xf32>
    %110 = vector.broadcast %89 : vector<1x32xf32> to vector<8x32xf32>
    %111 = arith.mulf %109, %110 : vector<8x32xf32>
    %112 = vector.broadcast %91 : vector<1x32xf32> to vector<8x32xf32>
    %113 = arith.addf %111, %112 : vector<8x32xf32>
    %c0_50 = arith.constant 0 : index
    %c0_51 = arith.constant 0 : index
    %c0_52 = arith.constant 0 : index
    %114 = vector.load %arg11[%c0_50, %c0_51, %c0_52] : memref<2x32x64xf32, #tpu.memory_space<vmem>>, vector<1x32x64xf32>
    %115 = vector.shape_cast %114 : vector<1x32x64xf32> to vector<32x64xf32>
    %cst_53 = arith.constant dense<0.000000e+00> : vector<8x64xf32>
    %116 = tpu.matmul %113, %115, %cst_53 {dimension_numbers = #tpu.dot_dimension_numbers<[1], [0], [0], [1], [0, 0, 1, 1], [], []>} : vector<8x32xf32>, vector<32x64xf32>, vector<8x64xf32> -> vector<8x64xf32>
    %c0_54 = arith.constant 0 : index
    %c0_55 = arith.constant 0 : index
    %c0_56 = arith.constant 0 : index
    %117 = vector.load %arg12[%c0_54, %c0_55, %c0_56] : memref<2x1x64xf32, #tpu.memory_space<vmem>>, vector<1x1x64xf32>
    %118 = vector.shape_cast %117 : vector<1x1x64xf32> to vector<1x64xf32>
    %119 = vector.broadcast %118 : vector<1x64xf32> to vector<8x64xf32>
    %120 = arith.addf %116, %119 : vector<8x64xf32>
    %cst_57 = arith.constant 5.000000e-01 : f32
    %121 = vector.broadcast %cst_57 : f32 to vector<8x64xf32>
    %122 = arith.mulf %121, %120 : vector<8x64xf32>
    %cst_58 = arith.constant 4.471500e-02 : f32
    %123 = vector.broadcast %cst_58 : f32 to vector<8x64xf32>
    %124 = arith.mulf %123, %120 : vector<8x64xf32>
    %125 = arith.mulf %124, %120 : vector<8x64xf32>
    %126 = arith.mulf %125, %120 : vector<8x64xf32>
    %127 = arith.addf %120, %126 : vector<8x64xf32>
    %cst_59 = arith.constant 0.797884583 : f32
    %128 = vector.broadcast %cst_59 : f32 to vector<8x64xf32>
    %129 = arith.mulf %128, %127 : vector<8x64xf32>
    %130 = math.tanh %129 : vector<8x64xf32>
    %cst_60 = arith.constant 1.000000e+00 : f32
    %131 = vector.broadcast %cst_60 : f32 to vector<8x64xf32>
    %132 = arith.addf %131, %130 : vector<8x64xf32>
    %133 = arith.mulf %122, %132 : vector<8x64xf32>
    %c0_61 = arith.constant 0 : index
    %c0_62 = arith.constant 0 : index
    %c0_63 = arith.constant 0 : index
    %134 = vector.load %arg13[%c0_61, %c0_62, %c0_63] : memref<2x64x32xf32, #tpu.memory_space<vmem>>, vector<1x64x32xf32>
    %135 = vector.shape_cast %134 : vector<1x64x32xf32> to vector<64x32xf32>
    %cst_64 = arith.constant dense<0.000000e+00> : vector<8x32xf32>
    %136 = tpu.matmul %133, %135, %cst_64 {dimension_numbers = #tpu.dot_dimension_numbers<[1], [0], [0], [1], [0, 0, 1, 1], [], []>} : vector<8x64xf32>, vector<64x32xf32>, vector<8x32xf32> -> vector<8x32xf32>
    %c0_65 = arith.constant 0 : index
    %c0_66 = arith.constant 0 : index
    %c0_67 = arith.constant 0 : index
    %137 = vector.load %arg14[%c0_65, %c0_66, %c0_67] : memref<2x1x32xf32, #tpu.memory_space<vmem>>, vector<1x1x32xf32>
    %138 = vector.shape_cast %137 : vector<1x1x32xf32> to vector<1x32xf32>
    %139 = vector.broadcast %138 : vector<1x32xf32> to vector<8x32xf32>
    %140 = arith.addf %136, %139 : vector<8x32xf32>
    %141 = arith.addf %113, %140 : vector<8x32xf32>
    %c0_68 = arith.constant 0 : index
    %c0_69 = arith.constant 0 : index
    %c0_70 = arith.constant 0 : index
    %142 = vector.load %arg15[%c0_68, %c0_69, %c0_70] : memref<2x1x32xf32, #tpu.memory_space<vmem>>, vector<1x1x32xf32>
    %143 = vector.shape_cast %142 : vector<1x1x32xf32> to vector<1x32xf32>
    %c0_71 = arith.constant 0 : index
    %c0_72 = arith.constant 0 : index
    %c0_73 = arith.constant 0 : index
    %144 = vector.load %arg16[%c0_71, %c0_72, %c0_73] : memref<2x1x32xf32, #tpu.memory_space<vmem>>, vector<1x1x32xf32>
    %145 = vector.shape_cast %144 : vector<1x1x32xf32> to vector<1x32xf32>
    %cst_74 = arith.constant dense<0.000000e+00> : vector<8xf32>
    %146 = vector.multi_reduction <add>, %141, %cst_74 [1] : vector<8x32xf32> to vector<8xf32>
    %147 = vector.shape_cast %146 : vector<8xf32> to vector<8x1xf32>
    %cst_75 = arith.constant 3.200000e+01 : f32
    %148 = vector.broadcast %cst_75 : f32 to vector<8x1xf32>
    %149 = arith.divf %147, %148 : vector<8x1xf32>
    %150 = vector.broadcast %149 : vector<8x1xf32> to vector<8x32xf32>
    %151 = arith.subf %141, %150 : vector<8x32xf32>
    %152 = arith.mulf %151, %151 : vector<8x32xf32>
    %cst_76 = arith.constant dense<0.000000e+00> : vector<8xf32>
    %153 = vector.multi_reduction <add>, %152, %cst_76 [1] : vector<8x32xf32> to vector<8xf32>
    %154 = vector.shape_cast %153 : vector<8xf32> to vector<8x1xf32>
    %cst_77 = arith.constant 3.200000e+01 : f32
    %155 = vector.broadcast %cst_77 : f32 to vector<8x1xf32>
    %156 = arith.divf %154, %155 : vector<8x1xf32>
    %157 = vector.broadcast %149 : vector<8x1xf32> to vector<8x32xf32>
    %158 = arith.subf %141, %157 : vector<8x32xf32>
    %cst_78 = arith.constant 9.99999996E-13 : f32
    %159 = vector.broadcast %cst_78 : f32 to vector<8x1xf32>
    %160 = arith.addf %156, %159 : vector<8x1xf32>
    %161 = math.rsqrt %160 : vector<8x1xf32>
    %162 = vector.broadcast %161 : vector<8x1xf32> to vector<8x32xf32>
    %163 = arith.mulf %158, %162 : vector<8x32xf32>
    %164 = vector.broadcast %143 : vector<1x32xf32> to vector<8x32xf32>
    %165 = arith.mulf %163, %164 : vector<8x32xf32>
    %166 = vector.broadcast %145 : vector<1x32xf32> to vector<8x32xf32>
    %167 = arith.addf %165, %166 : vector<8x32xf32>
    %c1 = arith.constant 1 : index
    %c0_79 = arith.constant 0 : index
    %c0_80 = arith.constant 0 : index
    %168 = vector.load %arg5[%c1, %c0_79, %c0_80] : memref<2x32x96xf32, #tpu.memory_space<vmem>>, vector<1x32x96xf32>
    %169 = vector.shape_cast %168 : vector<1x32x96xf32> to vector<32x96xf32>
    %cst_81 = arith.constant dense<0.000000e+00> : vector<8x96xf32>
    %170 = tpu.matmul %167, %169, %cst_81 {dimension_numbers = #tpu.dot_dimension_numbers<[1], [0], [0], [1], [0, 0, 1, 1], [], []>} : vector<8x32xf32>, vector<32x96xf32>, vector<8x96xf32> -> vector<8x96xf32>
    %c1_82 = arith.constant 1 : index
    %c0_83 = arith.constant 0 : index
    %c0_84 = arith.constant 0 : index
    %171 = vector.load %arg6[%c1_82, %c0_83, %c0_84] : memref<2x1x96xf32, #tpu.memory_space<vmem>>, vector<1x1x96xf32>
    %172 = vector.shape_cast %171 : vector<1x1x96xf32> to vector<1x96xf32>
    %173 = vector.broadcast %172 : vector<1x96xf32> to vector<8x96xf32>
    %174 = arith.addf %170, %173 : vector<8x96xf32>
    %175 = vector.extract_strided_slice %174 {offsets = [0, 0], sizes = [8, 16], strides = [1, 1]} : vector<8x96xf32> to vector<8x16xf32>
    %176 = vector.extract_strided_slice %174 {offsets = [0, 32], sizes = [8, 16], strides = [1, 1]} : vector<8x96xf32> to vector<8x16xf32>
    %177 = vector.extract_strided_slice %174 {offsets = [0, 64], sizes = [8, 16], strides = [1, 1]} : vector<8x96xf32> to vector<8x16xf32>
    %178 = tpu.transpose %176, [1, 0] : vector<8x16xf32> -> vector<16x8xf32>
    %cst_85 = arith.constant dense<0.000000e+00> : vector<8x8xf32>
    %179 = tpu.matmul %175, %178, %cst_85 {dimension_numbers = #tpu.dot_dimension_numbers<[1], [0], [0], [1], [0, 0, 1, 1], [], []>} : vector<8x16xf32>, vector<16x8xf32>, vector<8x8xf32> -> vector<8x8xf32>
    %cst_86 = arith.constant 2.500000e-01 : f32
    %180 = vector.broadcast %cst_86 : f32 to vector<8x8xf32>
    %181 = arith.mulf %179, %180 : vector<8x8xf32>
    %182 = vector.broadcast %31 : vector<1x8xf32> to vector<8x8xf32>
    %183 = arith.addf %181, %182 : vector<8x8xf32>
    %cst_87 = arith.constant dense<0xFF800000> : vector<8xf32>
    %184 = vector.multi_reduction <maximumf>, %183, %cst_87 [1] : vector<8x8xf32> to vector<8xf32>
    %185 = vector.shape_cast %184 : vector<8xf32> to vector<8x1xf32>
    %186 = vector.broadcast %185 : vector<8x1xf32> to vector<8x8xf32>
    %187 = arith.subf %183, %186 : vector<8x8xf32>
    %188 = math.exp %187 : vector<8x8xf32>
    %cst_88 = arith.constant dense<0.000000e+00> : vector<8xf32>
    %189 = vector.multi_reduction <add>, %188, %cst_88 [1] : vector<8x8xf32> to vector<8xf32>
    %190 = vector.shape_cast %189 : vector<8xf32> to vector<8x1xf32>
    %191 = tpu.reciprocal %190 {approx = true} : vector<8x1xf32> -> vector<8x1xf32>
    %192 = vector.broadcast %191 : vector<8x1xf32> to vector<8x8xf32>
    %193 = arith.mulf %188, %192 : vector<8x8xf32>
    %cst_89 = arith.constant dense<0.000000e+00> : vector<8x16xf32>
    %194 = tpu.matmul %193, %177, %cst_89 {dimension_numbers = #tpu.dot_dimension_numbers<[1], [0], [0], [1], [0, 0, 1, 1], [], []>} : vector<8x8xf32>, vector<8x16xf32>, vector<8x16xf32> -> vector<8x16xf32>
    %195 = vector.extract_strided_slice %174 {offsets = [0, 16], sizes = [8, 16], strides = [1, 1]} : vector<8x96xf32> to vector<8x16xf32>
    %196 = vector.extract_strided_slice %174 {offsets = [0, 48], sizes = [8, 16], strides = [1, 1]} : vector<8x96xf32> to vector<8x16xf32>
    %197 = vector.extract_strided_slice %174 {offsets = [0, 80], sizes = [8, 16], strides = [1, 1]} : vector<8x96xf32> to vector<8x16xf32>
    %198 = tpu.transpose %196, [1, 0] : vector<8x16xf32> -> vector<16x8xf32>
    %cst_90 = arith.constant dense<0.000000e+00> : vector<8x8xf32>
    %199 = tpu.matmul %195, %198, %cst_90 {dimension_numbers = #tpu.dot_dimension_numbers<[1], [0], [0], [1], [0, 0, 1, 1], [], []>} : vector<8x16xf32>, vector<16x8xf32>, vector<8x8xf32> -> vector<8x8xf32>
    %cst_91 = arith.constant 2.500000e-01 : f32
    %200 = vector.broadcast %cst_91 : f32 to vector<8x8xf32>
    %201 = arith.mulf %199, %200 : vector<8x8xf32>
    %202 = vector.broadcast %31 : vector<1x8xf32> to vector<8x8xf32>
    %203 = arith.addf %201, %202 : vector<8x8xf32>
    %cst_92 = arith.constant dense<0xFF800000> : vector<8xf32>
    %204 = vector.multi_reduction <maximumf>, %203, %cst_92 [1] : vector<8x8xf32> to vector<8xf32>
    %205 = vector.shape_cast %204 : vector<8xf32> to vector<8x1xf32>
    %206 = vector.broadcast %205 : vector<8x1xf32> to vector<8x8xf32>
    %207 = arith.subf %203, %206 : vector<8x8xf32>
    %208 = math.exp %207 : vector<8x8xf32>
    %cst_93 = arith.constant dense<0.000000e+00> : vector<8xf32>
    %209 = vector.multi_reduction <add>, %208, %cst_93 [1] : vector<8x8xf32> to vector<8xf32>
    %210 = vector.shape_cast %209 : vector<8xf32> to vector<8x1xf32>
    %211 = tpu.reciprocal %210 {approx = true} : vector<8x1xf32> -> vector<8x1xf32>
    %212 = vector.broadcast %211 : vector<8x1xf32> to vector<8x8xf32>
    %213 = arith.mulf %208, %212 : vector<8x8xf32>
    %cst_94 = arith.constant dense<0.000000e+00> : vector<8x16xf32>
    %214 = tpu.matmul %213, %197, %cst_94 {dimension_numbers = #tpu.dot_dimension_numbers<[1], [0], [0], [1], [0, 0, 1, 1], [], []>} : vector<8x8xf32>, vector<8x16xf32>, vector<8x16xf32> -> vector<8x16xf32>
    %215 = tpu.concatenate %194, %214 in 1 : vector<8x16xf32>, vector<8x16xf32> -> vector<8x32xf32>
    %c1_95 = arith.constant 1 : index
    %c0_96 = arith.constant 0 : index
    %c0_97 = arith.constant 0 : index
    %216 = vector.load %arg7[%c1_95, %c0_96, %c0_97] : memref<2x32x32xf32, #tpu.memory_space<vmem>>, vector<1x32x32xf32>
    %217 = vector.shape_cast %216 : vector<1x32x32xf32> to vector<32x32xf32>
    %cst_98 = arith.constant dense<0.000000e+00> : vector<8x32xf32>
    %218 = tpu.matmul %215, %217, %cst_98 {dimension_numbers = #tpu.dot_dimension_numbers<[1], [0], [0], [1], [0, 0, 1, 1], [], []>} : vector<8x32xf32>, vector<32x32xf32>, vector<8x32xf32> -> vector<8x32xf32>
    %c1_99 = arith.constant 1 : index
    %c0_100 = arith.constant 0 : index
    %c0_101 = arith.constant 0 : index
    %219 = vector.load %arg8[%c1_99, %c0_100, %c0_101] : memref<2x1x32xf32, #tpu.memory_space<vmem>>, vector<1x1x32xf32>
    %220 = vector.shape_cast %219 : vector<1x1x32xf32> to vector<1x32xf32>
    %221 = vector.broadcast %220 : vector<1x32xf32> to vector<8x32xf32>
    %222 = arith.addf %218, %221 : vector<8x32xf32>
    %223 = arith.addf %167, %222 : vector<8x32xf32>
    %c1_102 = arith.constant 1 : index
    %c0_103 = arith.constant 0 : index
    %c0_104 = arith.constant 0 : index
    %224 = vector.load %arg9[%c1_102, %c0_103, %c0_104] : memref<2x1x32xf32, #tpu.memory_space<vmem>>, vector<1x1x32xf32>
    %225 = vector.shape_cast %224 : vector<1x1x32xf32> to vector<1x32xf32>
    %c1_105 = arith.constant 1 : index
    %c0_106 = arith.constant 0 : index
    %c0_107 = arith.constant 0 : index
    %226 = vector.load %arg10[%c1_105, %c0_106, %c0_107] : memref<2x1x32xf32, #tpu.memory_space<vmem>>, vector<1x1x32xf32>
    %227 = vector.shape_cast %226 : vector<1x1x32xf32> to vector<1x32xf32>
    %cst_108 = arith.constant dense<0.000000e+00> : vector<8xf32>
    %228 = vector.multi_reduction <add>, %223, %cst_108 [1] : vector<8x32xf32> to vector<8xf32>
    %229 = vector.shape_cast %228 : vector<8xf32> to vector<8x1xf32>
    %cst_109 = arith.constant 3.200000e+01 : f32
    %230 = vector.broadcast %cst_109 : f32 to vector<8x1xf32>
    %231 = arith.divf %229, %230 : vector<8x1xf32>
    %232 = vector.broadcast %231 : vector<8x1xf32> to vector<8x32xf32>
    %233 = arith.subf %223, %232 : vector<8x32xf32>
    %234 = arith.mulf %233, %233 : vector<8x32xf32>
    %cst_110 = arith.constant dense<0.000000e+00> : vector<8xf32>
    %235 = vector.multi_reduction <add>, %234, %cst_110 [1] : vector<8x32xf32> to vector<8xf32>
    %236 = vector.shape_cast %235 : vector<8xf32> to vector<8x1xf32>
    %cst_111 = arith.constant 3.200000e+01 : f32
    %237 = vector.broadcast %cst_111 : f32 to vector<8x1xf32>
    %238 = arith.divf %236, %237 : vector<8x1xf32>
    %239 = vector.broadcast %231 : vector<8x1xf32> to vector<8x32xf32>
    %240 = arith.subf %223, %239 : vector<8x32xf32>
    %cst_112 = arith.constant 9.99999996E-13 : f32
    %241 = vector.broadcast %cst_112 : f32 to vector<8x1xf32>
    %242 = arith.addf %238, %241 : vector<8x1xf32>
    %243 = math.rsqrt %242 : vector<8x1xf32>
    %244 = vector.broadcast %243 : vector<8x1xf32> to vector<8x32xf32>
    %245 = arith.mulf %240, %244 : vector<8x32xf32>
    %246 = vector.broadcast %225 : vector<1x32xf32> to vector<8x32xf32>
    %247 = arith.mulf %245, %246 : vector<8x32xf32>
    %248 = vector.broadcast %227 : vector<1x32xf32> to vector<8x32xf32>
    %249 = arith.addf %247, %248 : vector<8x32xf32>
    %c1_113 = arith.constant 1 : index
    %c0_114 = arith.constant 0 : index
    %c0_115 = arith.constant 0 : index
    %250 = vector.load %arg11[%c1_113, %c0_114, %c0_115] : memref<2x32x64xf32, #tpu.memory_space<vmem>>, vector<1x32x64xf32>
    %251 = vector.shape_cast %250 : vector<1x32x64xf32> to vector<32x64xf32>
    %cst_116 = arith.constant dense<0.000000e+00> : vector<8x64xf32>
    %252 = tpu.matmul %249, %251, %cst_116 {dimension_numbers = #tpu.dot_dimension_numbers<[1], [0], [0], [1], [0, 0, 1, 1], [], []>} : vector<8x32xf32>, vector<32x64xf32>, vector<8x64xf32> -> vector<8x64xf32>
    %c1_117 = arith.constant 1 : index
    %c0_118 = arith.constant 0 : index
    %c0_119 = arith.constant 0 : index
    %253 = vector.load %arg12[%c1_117, %c0_118, %c0_119] : memref<2x1x64xf32, #tpu.memory_space<vmem>>, vector<1x1x64xf32>
    %254 = vector.shape_cast %253 : vector<1x1x64xf32> to vector<1x64xf32>
    %255 = vector.broadcast %254 : vector<1x64xf32> to vector<8x64xf32>
    %256 = arith.addf %252, %255 : vector<8x64xf32>
    %cst_120 = arith.constant 5.000000e-01 : f32
    %257 = vector.broadcast %cst_120 : f32 to vector<8x64xf32>
    %258 = arith.mulf %257, %256 : vector<8x64xf32>
    %cst_121 = arith.constant 4.471500e-02 : f32
    %259 = vector.broadcast %cst_121 : f32 to vector<8x64xf32>
    %260 = arith.mulf %259, %256 : vector<8x64xf32>
    %261 = arith.mulf %260, %256 : vector<8x64xf32>
    %262 = arith.mulf %261, %256 : vector<8x64xf32>
    %263 = arith.addf %256, %262 : vector<8x64xf32>
    %cst_122 = arith.constant 0.797884583 : f32
    %264 = vector.broadcast %cst_122 : f32 to vector<8x64xf32>
    %265 = arith.mulf %264, %263 : vector<8x64xf32>
    %266 = math.tanh %265 : vector<8x64xf32>
    %cst_123 = arith.constant 1.000000e+00 : f32
    %267 = vector.broadcast %cst_123 : f32 to vector<8x64xf32>
    %268 = arith.addf %267, %266 : vector<8x64xf32>
    %269 = arith.mulf %258, %268 : vector<8x64xf32>
    %c1_124 = arith.constant 1 : index
    %c0_125 = arith.constant 0 : index
    %c0_126 = arith.constant 0 : index
    %270 = vector.load %arg13[%c1_124, %c0_125, %c0_126] : memref<2x64x32xf32, #tpu.memory_space<vmem>>, vector<1x64x32xf32>
    %271 = vector.shape_cast %270 : vector<1x64x32xf32> to vector<64x32xf32>
    %cst_127 = arith.constant dense<0.000000e+00> : vector<8x32xf32>
    %272 = tpu.matmul %269, %271, %cst_127 {dimension_numbers = #tpu.dot_dimension_numbers<[1], [0], [0], [1], [0, 0, 1, 1], [], []>} : vector<8x64xf32>, vector<64x32xf32>, vector<8x32xf32> -> vector<8x32xf32>
    %c1_128 = arith.constant 1 : index
    %c0_129 = arith.constant 0 : index
    %c0_130 = arith.constant 0 : index
    %273 = vector.load %arg14[%c1_128, %c0_129, %c0_130] : memref<2x1x32xf32, #tpu.memory_space<vmem>>, vector<1x1x32xf32>
    %274 = vector.shape_cast %273 : vector<1x1x32xf32> to vector<1x32xf32>
    %275 = vector.broadcast %274 : vector<1x32xf32> to vector<8x32xf32>
    %276 = arith.addf %272, %275 : vector<8x32xf32>
    %277 = arith.addf %249, %276 : vector<8x32xf32>
    %c1_131 = arith.constant 1 : index
    %c0_132 = arith.constant 0 : index
    %c0_133 = arith.constant 0 : index
    %278 = vector.load %arg15[%c1_131, %c0_132, %c0_133] : memref<2x1x32xf32, #tpu.memory_space<vmem>>, vector<1x1x32xf32>
    %279 = vector.shape_cast %278 : vector<1x1x32xf32> to vector<1x32xf32>
    %c1_134 = arith.constant 1 : index
    %c0_135 = arith.constant 0 : index
    %c0_136 = arith.constant 0 : index
    %280 = vector.load %arg16[%c1_134, %c0_135, %c0_136] : memref<2x1x32xf32, #tpu.memory_space<vmem>>, vector<1x1x32xf32>
    %281 = vector.shape_cast %280 : vector<1x1x32xf32> to vector<1x32xf32>
    %cst_137 = arith.constant dense<0.000000e+00> : vector<8xf32>
    %282 = vector.multi_reduction <add>, %277, %cst_137 [1] : vector<8x32xf32> to vector<8xf32>
    %283 = vector.shape_cast %282 : vector<8xf32> to vector<8x1xf32>
    %cst_138 = arith.constant 3.200000e+01 : f32
    %284 = vector.broadcast %cst_138 : f32 to vector<8x1xf32>
    %285 = arith.divf %283, %284 : vector<8x1xf32>
    %286 = vector.broadcast %285 : vector<8x1xf32> to vector<8x32xf32>
    %287 = arith.subf %277, %286 : vector<8x32xf32>
    %288 = arith.mulf %287, %287 : vector<8x32xf32>
    %cst_139 = arith.constant dense<0.000000e+00> : vector<8xf32>
    %289 = vector.multi_reduction <add>, %288, %cst_139 [1] : vector<8x32xf32> to vector<8xf32>
    %290 = vector.shape_cast %289 : vector<8xf32> to vector<8x1xf32>
    %cst_140 = arith.constant 3.200000e+01 : f32
    %291 = vector.broadcast %cst_140 : f32 to vector<8x1xf32>
    %292 = arith.divf %290, %291 : vector<8x1xf32>
    %293 = vector.broadcast %285 : vector<8x1xf32> to vector<8x32xf32>
    %294 = arith.subf %277, %293 : vector<8x32xf32>
    %cst_141 = arith.constant 9.99999996E-13 : f32
    %295 = vector.broadcast %cst_141 : f32 to vector<8x1xf32>
    %296 = arith.addf %292, %295 : vector<8x1xf32>
    %297 = math.rsqrt %296 : vector<8x1xf32>
    %298 = vector.broadcast %297 : vector<8x1xf32> to vector<8x32xf32>
    %299 = arith.mulf %294, %298 : vector<8x32xf32>
    %300 = vector.broadcast %279 : vector<1x32xf32> to vector<8x32xf32>
    %301 = arith.mulf %299, %300 : vector<8x32xf32>
    %302 = vector.broadcast %281 : vector<1x32xf32> to vector<8x32xf32>
    %303 = arith.addf %301, %302 : vector<8x32xf32>
    %c0_142 = arith.constant 0 : index
    %c0_143 = arith.constant 0 : index
    %304 = vector.load %arg17[%c0_142, %c0_143] : memref<32x2xf32, #tpu.memory_space<vmem>>, vector<32x2xf32>
    %cst_144 = arith.constant dense<0.000000e+00> : vector<8x2xf32>
    %305 = tpu.matmul %303, %304, %cst_144 {dimension_numbers = #tpu.dot_dimension_numbers<[1], [0], [0], [1], [0, 0, 1, 1], [], []>} : vector<8x32xf32>, vector<32x2xf32>, vector<8x2xf32> -> vector<8x2xf32>
    %c0_145 = arith.constant 0 : index
    %c0_146 = arith.constant 0 : index
    %306 = vector.load %arg18[%c0_145, %c0_146] : memref<1x2xf32, #tpu.memory_space<vmem>>, vector<1x2xf32>
    %307 = vector.broadcast %306 : vector<1x2xf32> to vector<8x2xf32>
    %308 = arith.addf %305, %307 : vector<8x2xf32>
    %c0_147 = arith.constant 0 : index
    %c0_148 = arith.constant 0 : index
    %c0_149 = arith.constant 0 : index
    %309 = vector.load %arg25[%c0_147, %c0_148, %c0_149] : memref<1x8x2xf32, #tpu.memory_space<vmem>>, vector<1x8x2xf32>
    %310 = vector.shape_cast %309 : vector<1x8x2xf32> to vector<8x2xf32>
    %311 = vector.shape_cast %308 : vector<8x2xf32> to vector<1x8x2xf32>
    tpu.vector_store %arg25[%c0_147, %c0_148, %c0_149], %311 {strides = array<i32>} : memref<1x8x2xf32, #tpu.memory_space<vmem>>, vector<1x8x2xf32>,
    %c0_150 = arith.constant 0 : index
    %c0_151 = arith.constant 0 : index
    %312 = vector.load %arg19[%c0_150, %c0_151] : memref<32x64xf32, #tpu.memory_space<vmem>>, vector<32x64xf32>
    %cst_152 = arith.constant dense<0.000000e+00> : vector<8x64xf32>
    %313 = tpu.matmul %303, %312, %cst_152 {dimension_numbers = #tpu.dot_dimension_numbers<[1], [0], [0], [1], [0, 0, 1, 1], [], []>} : vector<8x32xf32>, vector<32x64xf32>, vector<8x64xf32> -> vector<8x64xf32>
    %c0_153 = arith.constant 0 : index
    %c0_154 = arith.constant 0 : index
    %314 = vector.load %arg20[%c0_153, %c0_154] : memref<32x64xf32, #tpu.memory_space<vmem>>, vector<32x64xf32>
    %cst_155 = arith.constant dense<0.000000e+00> : vector<8x64xf32>
    %315 = tpu.matmul %303, %314, %cst_155 {dimension_numbers = #tpu.dot_dimension_numbers<[1], [0], [0], [1], [0, 0, 1, 1], [], []>} : vector<8x32xf32>, vector<32x64xf32>, vector<8x64xf32> -> vector<8x64xf32>
    %316 = vector.shape_cast %313 : vector<8x64xf32> to vector<8x1x64xf32>
    %317 = vector.shape_cast %315 : vector<8x64xf32> to vector<1x8x64xf32>
    %318 = vector.broadcast %316 : vector<8x1x64xf32> to vector<8x8x64xf32>
    %319 = vector.broadcast %317 : vector<1x8x64xf32> to vector<8x8x64xf32>
    %320 = arith.addf %318, %319 : vector<8x8x64xf32>
    %c0_156 = arith.constant 0 : index
    %c0_157 = arith.constant 0 : index
    %321 = vector.load %arg21[%c0_156, %c0_157] : memref<1x64xf32, #tpu.memory_space<vmem>>, vector<1x64xf32>
    %322 = vector.shape_cast %321 : vector<1x64xf32> to vector<1x1x64xf32>
    %323 = vector.broadcast %322 : vector<1x1x64xf32> to vector<8x8x64xf32>
    %324 = arith.addf %320, %323 : vector<8x8x64xf32>
    %cst_158 = arith.constant 5.000000e-01 : f32
    %325 = vector.broadcast %cst_158 : f32 to vector<8x8x64xf32>
    %326 = arith.mulf %325, %324 : vector<8x8x64xf32>
    %cst_159 = arith.constant 4.471500e-02 : f32
    %327 = vector.broadcast %cst_159 : f32 to vector<8x8x64xf32>
    %328 = arith.mulf %327, %324 : vector<8x8x64xf32>
    %329 = arith.mulf %328, %324 : vector<8x8x64xf32>
    %330 = arith.mulf %329, %324 : vector<8x8x64xf32>
    %331 = arith.addf %324, %330 : vector<8x8x64xf32>
    %cst_160 = arith.constant 0.797884583 : f32
    %332 = vector.broadcast %cst_160 : f32 to vector<8x8x64xf32>
    %333 = arith.mulf %332, %331 : vector<8x8x64xf32>
    %334 = math.tanh %333 : vector<8x8x64xf32>
    %cst_161 = arith.constant 1.000000e+00 : f32
    %335 = vector.broadcast %cst_161 : f32 to vector<8x8x64xf32>
    %336 = arith.addf %335, %334 : vector<8x8x64xf32>
    %337 = arith.mulf %326, %336 : vector<8x8x64xf32>
    %c0_162 = arith.constant 0 : index
    %c0_163 = arith.constant 0 : index
    %338 = vector.load %arg22[%c0_162, %c0_163] : memref<1x64xf32, #tpu.memory_space<vmem>>, vector<1x64xf32>
    %339 = vector.shape_cast %338 : vector<1x64xf32> to vector<1x1x64xf32>
    %340 = vector.broadcast %339 : vector<1x1x64xf32> to vector<8x8x64xf32>
    %341 = arith.mulf %337, %340 : vector<8x8x64xf32>
    %cst_164 = arith.constant dense<0.000000e+00> : vector<8x8xf32>
    %342 = vector.multi_reduction <add>, %341, %cst_164 [2] : vector<8x8x64xf32> to vector<8x8xf32>
    %c0_165 = arith.constant 0 : index
    %c0_166 = arith.constant 0 : index
    %343 = memref.load %arg23[%c0_165, %c0_166] : memref<1x1xf32, #tpu.memory_space<smem>>
    %344 = vector.broadcast %343 : f32 to vector<8x8xf32>
    %345 = arith.addf %342, %344 : vector<8x8xf32>
    %c0_167 = arith.constant 0 : index
    %c0_168 = arith.constant 0 : index
    %c0_169 = arith.constant 0 : index
    %346 = vector.load %arg24[%c0_167, %c0_168, %c0_169] : memref<1x8x8xf32, #tpu.memory_space<vmem>>, vector<1x8x8xf32>
    %347 = vector.shape_cast %346 : vector<1x8x8xf32> to vector<8x8xf32>
    %348 = vector.shape_cast %345 : vector<8x8xf32> to vector<1x8x8xf32>
    tpu.vector_store %arg24[%c0_167, %c0_168, %c0_169], %348 {strides = array<i32>} : memref<1x8x8xf32, #tpu.memory_space<vmem>>, vector<1x8x8xf32>,
    return
  }
  func.func @transform_0(%arg0: i32) -> (i32, i32, i32) {
    %c0_i32 = arith.constant 0 : i32
    %c0_i32_0 = arith.constant 0 : i32
    %c0_i32_1 = arith.constant 0 : i32
    return %arg0, %c0_i32, %c0_i32_0 : i32, i32, i32
  }
  func.func @transform_1(%arg0: i32) -> (i32, i32, i32) {
    %c0_i32 = arith.constant 0 : i32
    %c0_i32_0 = arith.constant 0 : i32
    %c0_i32_1 = arith.constant 0 : i32
    return %arg0, %c0_i32, %c0_i32_0 : i32, i32, i32
  }
  func.func @transform_2(%arg0: i32) -> (i32, i32) {
    %c0_i32 = arith.constant 0 : i32
    %c0_i32_0 = arith.constant 0 : i32
    %c0_i32_1 = arith.constant 0 : i32
    return %c0_i32, %c0_i32_0 : i32, i32
  }
  func.func @transform_3(%arg0: i32) -> (i32, i32) {
    %c0_i32 = arith.constant 0 : i32
    %c0_i32_0 = arith.constant 0 : i32
    %c0_i32_1 = arith.constant 0 : i32
    return %c0_i32, %c0_i32_0 : i32, i32
  }
  func.func @transform_4(%arg0: i32) -> (i32, i32, i32) {
    %c0_i32 = arith.constant 0 : i32
    %c0_i32_0 = arith.constant 0 : i32
    %c0_i32_1 = arith.constant 0 : i32
    %c0_i32_2 = arith.constant 0 : i32
    return %c0_i32, %c0_i32_0, %c0_i32_1 : i32, i32, i32
  }
  func.func @transform_5(%arg0: i32) -> (i32, i32, i32) {
    %c0_i32 = arith.constant 0 : i32
    %c0_i32_0 = arith.constant 0 : i32
    %c0_i32_1 = arith.constant 0 : i32
    %c0_i32_2 = arith.constant 0 : i32
    return %c0_i32, %c0_i32_0, %c0_i32_1 : i32, i32, i32
  }
  func.func @transform_6(%arg0: i32) -> (i32, i32, i32) {
    %c0_i32 = arith.constant 0 : i32
    %c0_i32_0 = arith.constant 0 : i32
    %c0_i32_1 = arith.constant 0 : i32
    %c0_i32_2 = arith.constant 0 : i32
    return %c0_i32, %c0_i32_0, %c0_i32_1 : i32, i32, i32
  }
  func.func @transform_7(%arg0: i32) -> (i32, i32, i32) {
    %c0_i32 = arith.constant 0 : i32
    %c0_i32_0 = arith.constant 0 : i32
    %c0_i32_1 = arith.constant 0 : i32
    %c0_i32_2 = arith.constant 0 : i32
    return %c0_i32, %c0_i32_0, %c0_i32_1 : i32, i32, i32
  }
  func.func @transform_8(%arg0: i32) -> (i32, i32, i32) {
    %c0_i32 = arith.constant 0 : i32
    %c0_i32_0 = arith.constant 0 : i32
    %c0_i32_1 = arith.constant 0 : i32
    %c0_i32_2 = arith.constant 0 : i32
    return %c0_i32, %c0_i32_0, %c0_i32_1 : i32, i32, i32
  }
  func.func @transform_9(%arg0: i32) -> (i32, i32, i32) {
    %c0_i32 = arith.constant 0 : i32
    %c0_i32_0 = arith.constant 0 : i32
    %c0_i32_1 = arith.constant 0 : i32
    %c0_i32_2 = arith.constant 0 : i32
    return %c0_i32, %c0_i32_0, %c0_i32_1 : i32, i32, i32
  }
  func.func @transform_10(%arg0: i32) -> (i32, i32, i32) {
    %c0_i32 = arith.constant 0 : i32
    %c0_i32_0 = arith.constant 0 : i32
    %c0_i32_1 = arith.constant 0 : i32
    %c0_i32_2 = arith.constant 0 : i32
    return %c0_i32, %c0_i32_0, %c0_i32_1 : i32, i32, i32
  }
  func.func @transform_11(%arg0: i32) -> (i32, i32, i32) {
    %c0_i32 = arith.constant 0 : i32
    %c0_i32_0 = arith.constant 0 : i32
    %c0_i32_1 = arith.constant 0 : i32
    %c0_i32_2 = arith.constant 0 : i32
    return %c0_i32, %c0_i32_0, %c0_i32_1 : i32, i32, i32
  }
  func.func @transform_12(%arg0: i32) -> (i32, i32, i32) {
    %c0_i32 = arith.constant 0 : i32
    %c0_i32_0 = arith.constant 0 : i32
    %c0_i32_1 = arith.constant 0 : i32
    %c0_i32_2 = arith.constant 0 : i32
    return %c0_i32, %c0_i32_0, %c0_i32_1 : i32, i32, i32
  }
  func.func @transform_13(%arg0: i32) -> (i32, i32, i32) {
    %c0_i32 = arith.constant 0 : i32
    %c0_i32_0 = arith.constant 0 : i32
    %c0_i32_1 = arith.constant 0 : i32
    %c0_i32_2 = arith.constant 0 : i32
    return %c0_i32, %c0_i32_0, %c0_i32_1 : i32, i32, i32
  }
  func.func @transform_14(%arg0: i32) -> (i32, i32, i32) {
    %c0_i32 = arith.constant 0 : i32
    %c0_i32_0 = arith.constant 0 : i32
    %c0_i32_1 = arith.constant 0 : i32
    %c0_i32_2 = arith.constant 0 : i32
    return %c0_i32, %c0_i32_0, %c0_i32_1 : i32, i32, i32
  }
  func.func @transform_15(%arg0: i32) -> (i32, i32, i32) {
    %c0_i32 = arith.constant 0 : i32
    %c0_i32_0 = arith.constant 0 : i32
    %c0_i32_1 = arith.constant 0 : i32
    %c0_i32_2 = arith.constant 0 : i32
    return %c0_i32, %c0_i32_0, %c0_i32_1 : i32, i32, i32
  }
  func.func @transform_16(%arg0: i32) -> (i32, i32) {
    %c0_i32 = arith.constant 0 : i32
    %c0_i32_0 = arith.constant 0 : i32
    %c0_i32_1 = arith.constant 0 : i32
    return %c0_i32, %c0_i32_0 : i32, i32
  }
  func.func @transform_17(%arg0: i32) -> (i32, i32) {
    %c0_i32 = arith.constant 0 : i32
    %c0_i32_0 = arith.constant 0 : i32
    %c0_i32_1 = arith.constant 0 : i32
    return %c0_i32, %c0_i32_0 : i32, i32
  }
  func.func @transform_18(%arg0: i32) -> (i32, i32) {
    %c0_i32 = arith.constant 0 : i32
    %c0_i32_0 = arith.constant 0 : i32
    %c0_i32_1 = arith.constant 0 : i32
    return %c0_i32, %c0_i32_0 : i32, i32
  }
  func.func @transform_19(%arg0: i32) -> (i32, i32) {
    %c0_i32 = arith.constant 0 : i32
    %c0_i32_0 = arith.constant 0 : i32
    %c0_i32_1 = arith.constant 0 : i32
    return %c0_i32, %c0_i32_0 : i32, i32
  }
  func.func @transform_20(%arg0: i32) -> (i32, i32) {
    %c0_i32 = arith.constant 0 : i32
    %c0_i32_0 = arith.constant 0 : i32
    %c0_i32_1 = arith.constant 0 : i32
    return %c0_i32, %c0_i32_0 : i32, i32
  }
  func.func @transform_21(%arg0: i32) -> (i32, i32) {
    %c0_i32 = arith.constant 0 : i32
    %c0_i32_0 = arith.constant 0 : i32
    %c0_i32_1 = arith.constant 0 : i32
    return %c0_i32, %c0_i32_0 : i32, i32
  }
  func.func @transform_22(%arg0: i32) -> (i32, i32) {
    %c0_i32 = arith.constant 0 : i32
    %c0_i32_0 = arith.constant 0 : i32
    %c0_i32_1 = arith.constant 0 : i32
    return %c0_i32, %c0_i32_0 : i32, i32
  }
  func.func @transform_23(%arg0: i32) -> (i32, i32, i32) {
    %c0_i32 = arith.constant 0 : i32
    %c0_i32_0 = arith.constant 0 : i32
    %c0_i32_1 = arith.constant 0 : i32
    return %arg0, %c0_i32, %c0_i32_0 : i32, i32, i32
  }
  func.func @transform_24(%arg0: i32) -> (i32, i32, i32) {
    %c0_i32 = arith.constant 0 : i32
    %c0_i32_0 = arith.constant 0 : i32
    %c0_i32_1 = arith.constant 0 : i32
    return %arg0, %c0_i32, %c0_i32_0 : i32, i32, i32
  }
}

</mosaic_0001>

<llo_original>
// kernel: mrc_forward_pallas.1
$region0: #{mrc_forward_pallas.1}
  #allocation0 [shape = 'u32[]', space=smem, size = 0x4, offset = 0x4, fixed_abs, tag = 'smem constant byte address 0x4 - core index']
  #allocation1 [shape = 'u32[72,128]{1,0:T(1,128)}', space=vmem, size = 0x9000, scoped, tag = 'internal scratch']
  #allocation2 [shape = 'f32[1,1]{1,0:T(1,128)S(6)}', space=smem, size = 0x200, scoped, tag = 'scoped memory for mrc_forward_pallas.1']
  %s0 = inlined_call_operand.vmem [shape: f32[2,8,32], index: 0, kind: input, shape index: {}]
  %s1 = inlined_call_operand.vmem [shape: f32[2,1,8], index: 1, kind: input, shape index: {}]
  %s2 = inlined_call_operand.vmem [shape: f32[1,32], index: 2, kind: input, shape index: {}]
  %s3 = inlined_call_operand.vmem [shape: f32[1,32], index: 3, kind: input, shape index: {}]
  %s4 = inlined_call_operand.vmem [shape: f32[2,32,96], index: 4, kind: input, shape index: {}]
  %s5 = inlined_call_operand.vmem [shape: f32[2,1,96], index: 5, kind: input, shape index: {}]
  %s6 = inlined_call_operand.vmem [shape: f32[2,32,32], index: 6, kind: input, shape index: {}]
  %s7 = inlined_call_operand.vmem [shape: f32[2,1,32], index: 7, kind: input, shape index: {}]
  %s8 = inlined_call_operand.vmem [shape: f32[2,1,32], index: 8, kind: input, shape index: {}]
  %s9 = inlined_call_operand.vmem [shape: f32[2,1,32], index: 9, kind: input, shape index: {}]
  %s10 = inlined_call_operand.vmem [shape: f32[2,32,64], index: 10, kind: input, shape index: {}]
  %s11 = inlined_call_operand.vmem [shape: f32[2,1,64], index: 11, kind: input, shape index: {}]
  %s12 = inlined_call_operand.vmem [shape: f32[2,64,32], index: 12, kind: input, shape index: {}]
  %s13 = inlined_call_operand.vmem [shape: f32[2,1,32], index: 13, kind: input, shape index: {}]
  %s14 = inlined_call_operand.vmem [shape: f32[2,1,32], index: 14, kind: input, shape index: {}]
  %s15 = inlined_call_operand.vmem [shape: f32[2,1,32], index: 15, kind: input, shape index: {}]
  %s16 = inlined_call_operand.vmem [shape: f32[32,2], index: 16, kind: input, shape index: {}]
  %s17 = inlined_call_operand.vmem [shape: f32[1,2], index: 17, kind: input, shape index: {}]
  %s18 = inlined_call_operand.vmem [shape: f32[32,64], index: 18, kind: input, shape index: {}]
  %s19 = inlined_call_operand.vmem [shape: f32[32,64], index: 19, kind: input, shape index: {}]
  %s20 = inlined_call_operand.vmem [shape: f32[1,64], index: 20, kind: input, shape index: {}]
  %s21 = inlined_call_operand.vmem [shape: f32[1,64], index: 21, kind: input, shape index: {}]
  %s22 = inlined_call_operand.<no memory space> [shape: f32[1,1], index: 22, kind: input, shape index: {}]
  %s23 = inlined_call_operand.hbm [shape: f32[2,8,8], index: 23, kind: output, shape index: {0}]
  %s24 = inlined_call_operand.vmem [shape: f32[2,8,2], index: 24, kind: output, shape index: {1}]
  %25 = xla_tuple %s23, %s24
  %s26 = sld [smem:[#allocation0]]
  $region133: #{mrc_forward_pallas.1} parent=0
    _
  %s28 = ssub.s32 1, %s26
  %s29 = scalar_select 0, %s28, %s26
  %30 = sst [smem:[#allocation2]] %s22
  $region1: #{mrc_forward_pallas.1} parent=0
    #allocation3 [shape = 'u8[8192]{0}', space=vmem, size = 0x2000, scoped, tag = 'output window, operand 0']
    #allocation4 [shape = 's32[2]{0}', space=sflag, size = 0x8, scoped, tag = 'scoped memory for mrc_forward_pallas.1']
    %31 = vsyncpa [#allocation4], 0
    %s32 = scalar_lea.sflag [#allocation4], 1
    %33 = vsyncpa %s32, 0
    loop: start=0, step=1, limit=4
    $region2: #{mrc_forward_pallas.1} parent=1 // loop_pre_header
      _
    $region3: #{mrc_forward_pallas.1} parent=1 // loop_header
      %s35 = sphi 0, %s39
      %p36 = scmp.ge.s32.totalorder %s35, 4
      %s45 = sphi 0, %s47
      %s48 = sphi 0, %s45
      %s49 = sphi 0, %s48
      %s65 = sphi 0, %s49
      %s71 = sphi 0, %s73
      %s74 = sphi 0, %s71
      %s75 = sphi 0, %s74
      %s91 = sphi 0, %s75
      %s95 = sphi 0, %s95
      %s97 = sphi 0, %s95
      %s98 = sphi 0, %s97
      %s112 = sphi 0, %s98
      %s116 = sphi 0, %s116
      %s118 = sphi 0, %s116
      %s119 = sphi 0, %s118
      %s133 = sphi 0, %s119
      %s137 = sphi 0, %s137
      %s139 = sphi 0, %s137
      %s140 = sphi 0, %s139
      %s154 = sphi 0, %s140
      %s158 = sphi 0, %s158
      %s160 = sphi 0, %s158
      %s161 = sphi 0, %s160
      %s175 = sphi 0, %s161
      %s179 = sphi 0, %s179
      %s181 = sphi 0, %s179
      %s182 = sphi 0, %s181
      %s196 = sphi 0, %s182
      %s200 = sphi 0, %s200
      %s202 = sphi 0, %s200
      %s203 = sphi 0, %s202
      %s217 = sphi 0, %s203
      %s221 = sphi 0, %s221
      %s223 = sphi 0, %s221
      %s224 = sphi 0, %s223
      %s238 = sphi 0, %s224
      %s242 = sphi 0, %s242
      %s244 = sphi 0, %s242
      %s245 = sphi 0, %s244
      %s259 = sphi 0, %s245
      %s263 = sphi 0, %s263
      %s265 = sphi 0, %s263
      %s266 = sphi 0, %s265
      %s280 = sphi 0, %s266
      %s284 = sphi 0, %s284
      %s286 = sphi 0, %s284
      %s287 = sphi 0, %s286
      %s301 = sphi 0, %s287
      %s305 = sphi 0, %s305
      %s307 = sphi 0, %s305
      %s308 = sphi 0, %s307
      %s322 = sphi 0, %s308
      %s326 = sphi 0, %s326
      %s328 = sphi 0, %s326
      %s329 = sphi 0, %s328
      %s343 = sphi 0, %s329
      %s347 = sphi 0, %s347
      %s349 = sphi 0, %s347
      %s350 = sphi 0, %s349
      %s364 = sphi 0, %s350
      %s368 = sphi 0, %s368
      %s370 = sphi 0, %s368
      %s371 = sphi 0, %s370
      %s385 = sphi 0, %s371
      %s389 = sphi 0, %s389
      %s391 = sphi 0, %s389
      %s392 = sphi 0, %s391
      %s406 = sphi 0, %s392
      %s410 = sphi 0, %s410
      %s412 = sphi 0, %s410
      %s413 = sphi 0, %s412
      %s427 = sphi 0, %s413
      %s431 = sphi 0, %s431
      %s433 = sphi 0, %s431
      %s434 = sphi 0, %s433
      %s448 = sphi 0, %s434
      %s452 = sphi 0, %s452
      %s454 = sphi 0, %s452
      %s455 = sphi 0, %s454
      %s469 = sphi 0, %s455
      %s473 = sphi 0, %s473
      %s475 = sphi 0, %s473
      %s476 = sphi 0, %s475
      %s490 = sphi 0, %s476
      %s494 = sphi 0, %s494
      %s496 = sphi 0, %s494
      %s497 = sphi 0, %s496
      %s511 = sphi 0, %s497
      %s515 = sphi 0, %s515
      %s517 = sphi 0, %s515
      %s518 = sphi 0, %s517
      %s532 = sphi 0, %s518
      %s538 = sphi 0, %s540
      %s541 = sphi 0, %s538
      %s542 = sphi 0, %s541
      %s558 = sphi 0, %s542
      %s564 = sphi 0, %s566
      %s567 = sphi 0, %s564
      %s568 = sphi 0, %s567
      %s584 = sphi 0, %s568
    $region4: #{mrc_forward_pallas.1} parent=1 // loop_header_branch
      %38 = sbr.rel (%p36) target = $region8
    $region5: #{mrc_forward_pallas.1} parent=1 // loop_body
      %s40 = ssub.s32 %s35, 1
      %s41 = ssub.s32 %s35, 2
      %s42 = sadd.s32 %s35, 1
      %s43 = ssub.s32 %s35, %s42
      %p44 = scmp.eq.s32.totalorder %s43, 0
      %s46 = sadd.s32 %s45, 1
      %s47 = scalar_select %p44, %s45, %s46
      %p50 = pneg %p44
      %p51 = scmp.eq.s32.totalorder %s35, 1
      %p52 = por %p50, %p51
      %p53 = scmp.ne.s32.totalorder %s45, %s48
      %p54 = scmp.eq.s32.totalorder %s35, 0
      %p55 = por %p53, %p54
      %p56 = scmp.ne.s32.totalorder %s45, %s48
      %p57 = scmp.eq.s32.totalorder %s40, 1
      %p58 = por %p56, %p57
      %p59 = scmp.ne.s32.totalorder %s48, %s49
      %p60 = scmp.eq.s32.totalorder %s40, 0
      %p61 = por %p59, %p60
      %p62 = scmp.ne.s32.totalorder %s48, %s49
      %p63 = scmp.eq.s32.totalorder %s41, 1
      %p64 = por %p62, %p63
      %p66 = scmp.ne.s32.totalorder %s49, %s65
      %p67 = scmp.eq.s32.totalorder %s41, 0
      %p68 = por %p66, %p67
      %s69 = ssub.s32 %s35, %s42
      %p70 = scmp.eq.s32.totalorder %s69, 0
      %s72 = sadd.s32 %s71, 1
      %s73 = scalar_select %p70, %s71, %s72
      %p76 = pneg %p70
      %p77 = scmp.eq.s32.totalorder %s35, 1
      %p78 = por %p76, %p77
      %p79 = scmp.ne.s32.totalorder %s71, %s74
      %p80 = scmp.eq.s32.totalorder %s35, 0
      %p81 = por %p79, %p80
      %p82 = scmp.ne.s32.totalorder %s71, %s74
      %p83 = scmp.eq.s32.totalorder %s40, 1
      %p84 = por %p82, %p83
      %p85 = scmp.ne.s32.totalorder %s74, %s75
      %p86 = scmp.eq.s32.totalorder %s40, 0
      %p87 = por %p85, %p86
      %p88 = scmp.ne.s32.totalorder %s74, %s75
      %p89 = scmp.eq.s32.totalorder %s41, 1
      %p90 = por %p88, %p89
      %p92 = scmp.ne.s32.totalorder %s75, %s91
      %p93 = scmp.eq.s32.totalorder %s41, 0
      %p94 = por %p92, %p93
      %s96 = sadd.s32 %s95, 1
      %p99 = scmp.eq.s32.totalorder %s35, 1
      %p100 = scmp.ne.s32.totalorder %s95, %s97
      %p101 = scmp.eq.s32.totalorder %s35, 0
      %p102 = por %p100, %p101
      %p103 = scmp.ne.s32.totalorder %s95, %s97
      %p104 = scmp.eq.s32.totalorder %s40, 1
      %p105 = por %p103, %p104
      %p106 = scmp.ne.s32.totalorder %s97, %s98
      %p107 = scmp.eq.s32.totalorder %s40, 0
      %p108 = por %p106, %p107
      %p109 = scmp.ne.s32.totalorder %s97, %s98
      %p110 = scmp.eq.s32.totalorder %s41, 1
      %p111 = por %p109, %p110
      %p113 = scmp.ne.s32.totalorder %s98, %s112
      %p114 = scmp.eq.s32.totalorder %s41, 0
      %p115 = por %p113, %p114
      %s117 = sadd.s32 %s116, 1
      %p120 = scmp.eq.s32.totalorder %s35, 1
      %p121 = scmp.ne.s32.totalorder %s116, %s118
      %p122 = scmp.eq.s32.totalorder %s35, 0
      %p123 = por %p121, %p122
      %p124 = scmp.ne.s32.totalorder %s116, %s118
      %p125 = scmp.eq.s32.totalorder %s40, 1
      %p126 = por %p124, %p125
      %p127 = scmp.ne.s32.totalorder %s118, %s119
      %p128 = scmp.eq.s32.totalorder %s40, 0
      %p129 = por %p127, %p128
      %p130 = scmp.ne.s32.totalorder %s118, %s119
      %p131 = scmp.eq.s32.totalorder %s41, 1
      %p132 = por %p130, %p131
      %p134 = scmp.ne.s32.totalorder %s119, %s133
      %p135 = scmp.eq.s32.totalorder %s41, 0
      %p136 = por %p134, %p135
      %s138 = sadd.s32 %s137, 1
      %p141 = scmp.eq.s32.totalorder %s35, 1
      %p142 = scmp.ne.s32.totalorder %s137, %s139
      %p143 = scmp.eq.s32.totalorder %s35, 0
      %p144 = por %p142, %p143
      %p145 = scmp.ne.s32.totalorder %s137, %s139
      %p146 = scmp.eq.s32.totalorder %s40, 1
      %p147 = por %p145, %p146
      %p148 = scmp.ne.s32.totalorder %s139, %s140
      %p149 = scmp.eq.s32.totalorder %s40, 0
      %p150 = por %p148, %p149
      %p151 = scmp.ne.s32.totalorder %s139, %s140
      %p152 = scmp.eq.s32.totalorder %s41, 1
      %p153 = por %p151, %p152
      %p155 = scmp.ne.s32.totalorder %s140, %s154
      %p156 = scmp.eq.s32.totalorder %s41, 0
      %p157 = por %p155, %p156
      %s159 = sadd.s32 %s158, 1
      %p162 = scmp.eq.s32.totalorder %s35, 1
      %p163 = scmp.ne.s32.totalorder %s158, %s160
      %p164 = scmp.eq.s32.totalorder %s35, 0
      %p165 = por %p163, %p164
      %p166 = scmp.ne.s32.totalorder %s158, %s160
      %p167 = scmp.eq.s32.totalorder %s40, 1
      %p168 = por %p166, %p167
      %p169 = scmp.ne.s32.totalorder %s160, %s161
      %p170 = scmp.eq.s32.totalorder %s40, 0
      %p171 = por %p169, %p170
      %p172 = scmp.ne.s32.totalorder %s160, %s161
      %p173 = scmp.eq.s32.totalorder %s41, 1
      %p174 = por %p172, %p173
      %p176 = scmp.ne.s32.totalorder %s161, %s175
      %p177 = scmp.eq.s32.totalorder %s41, 0
      %p178 = por %p176, %p177
      %s180 = sadd.s32 %s179, 1
      %p183 = scmp.eq.s32.totalorder %s35, 1
      %p184 = scmp.ne.s32.totalorder %s179, %s181
      %p185 = scmp.eq.s32.totalorder %s35, 0
      %p186 = por %p184, %p185
      %p187 = scmp.ne.s32.totalorder %s179, %s181
      %p188 = scmp.eq.s32.totalorder %s40, 1
      %p189 = por %p187, %p188
      %p190 = scmp.ne.s32.totalorder %s181, %s182
      %p191 = scmp.eq.s32.totalorder %s40, 0
      %p192 = por %p190, %p191
      %p193 = scmp.ne.s32.totalorder %s181, %s182
      %p194 = scmp.eq.s32.totalorder %s41, 1
      %p195 = por %p193, %p194
      %p197 = scmp.ne.s32.totalorder %s182, %s196
      %p198 = scmp.eq.s32.totalorder %s41, 0
      %p199 = por %p197, %p198
      %s201 = sadd.s32 %s200, 1
      %p204 = scmp.eq.s32.totalorder %s35, 1
      %p205 = scmp.ne.s32.totalorder %s200, %s202
      %p206 = scmp.eq.s32.totalorder %s35, 0
      %p207 = por %p205, %p206
      %p208 = scmp.ne.s32.totalorder %s200, %s202
      %p209 = scmp.eq.s32.totalorder %s40, 1
      %p210 = por %p208, %p209
      %p211 = scmp.ne.s32.totalorder %s202, %s203
      %p212 = scmp.eq.s32.totalorder %s40, 0
      %p213 = por %p211, %p212
      %p214 = scmp.ne.s32.totalorder %s202, %s203
      %p215 = scmp.eq.s32.totalorder %s41, 1
      %p216 = por %p214, %p215
      %p218 = scmp.ne.s32.totalorder %s203, %s217
      %p219 = scmp.eq.s32.totalorder %s41, 0
      %p220 = por %p218, %p219
      %s222 = sadd.s32 %s221, 1
      %p225 = scmp.eq.s32.totalorder %s35, 1
      %p226 = scmp.ne.s32.totalorder %s221, %s223
      %p227 = scmp.eq.s32.totalorder %s35, 0
      %p228 = por %p226, %p227
      %p229 = scmp.ne.s32.totalorder %s221, %s223
      %p230 = scmp.eq.s32.totalorder %s40, 1
      %p231 = por %p229, %p230
      %p232 = scmp.ne.s32.totalorder %s223, %s224
      %p233 = scmp.eq.s32.totalorder %s40, 0
      %p234 = por %p232, %p233
      %p235 = scmp.ne.s32.totalorder %s223, %s224
      %p236 = scmp.eq.s32.totalorder %s41, 1
      %p237 = por %p235, %p236
      %p239 = scmp.ne.s32.totalorder %s224, %s238
      %p240 = scmp.eq.s32.totalorder %s41, 0
      %p241 = por %p239, %p240
      %s243 = sadd.s32 %s242, 1
      %p246 = scmp.eq.s32.totalorder %s35, 1
      %p247 = scmp.ne.s32.totalorder %s242, %s244
      %p248 = scmp.eq.s32.totalorder %s35, 0
      %p249 = por %p247, %p248
      %p250 = scmp.ne.s32.totalorder %s242, %s244
      %p251 = scmp.eq.s32.totalorder %s40, 1
      %p252 = por %p250, %p251
      %p253 = scmp.ne.s32.totalorder %s244, %s245
      %p254 = scmp.eq.s32.totalorder %s40, 0
      %p255 = por %p253, %p254
      %p256 = scmp.ne.s32.totalorder %s244, %s245
      %p257 = scmp.eq.s32.totalorder %s41, 1
      %p258 = por %p256, %p257
      %p260 = scmp.ne.s32.totalorder %s245, %s259
      %p261 = scmp.eq.s32.totalorder %s41, 0
      %p262 = por %p260, %p261
      %s264 = sadd.s32 %s263, 1
      %p267 = scmp.eq.s32.totalorder %s35, 1
      %p268 = scmp.ne.s32.totalorder %s263, %s265
      %p269 = scmp.eq.s32.totalorder %s35, 0
      %p270 = por %p268, %p269
      %p271 = scmp.ne.s32.totalorder %s263, %s265
      %p272 = scmp.eq.s32.totalorder %s40, 1
      %p273 = por %p271, %p272
      %p274 = scmp.ne.s32.totalorder %s265, %s266
      %p275 = scmp.eq.s32.totalorder %s40, 0
      %p276 = por %p274, %p275
      %p277 = scmp.ne.s32.totalorder %s265, %s266
      %p278 = scmp.eq.s32.totalorder %s41, 1
      %p279 = por %p277, %p278
      %p281 = scmp.ne.s32.totalorder %s266, %s280
      %p282 = scmp.eq.s32.totalorder %s41, 0
      %p283 = por %p281, %p282
      %s285 = sadd.s32 %s284, 1
      %p288 = scmp.eq.s32.totalorder %s35, 1
      %p289 = scmp.ne.s32.totalorder %s284, %s286
      %p290 = scmp.eq.s32.totalorder %s35, 0
      %p291 = por %p289, %p290
      %p292 = scmp.ne.s32.totalorder %s284, %s286
      %p293 = scmp.eq.s32.totalorder %s40, 1
      %p294 = por %p292, %p293
      %p295 = scmp.ne.s32.totalorder %s286, %s287
      %p296 = scmp.eq.s32.totalorder %s40, 0
      %p297 = por %p295, %p296
      %p298 = scmp.ne.s32.totalorder %s286, %s287
      %p299 = scmp.eq.s32.totalorder %s41, 1
      %p300 = por %p298, %p299
      %p302 = scmp.ne.s32.totalorder %s287, %s301
      %p303 = scmp.eq.s32.totalorder %s41, 0
      %p304 = por %p302, %p303
      %s306 = sadd.s32 %s305, 1
      %p309 = scmp.eq.s32.totalorder %s35, 1
      %p310 = scmp.ne.s32.totalorder %s305, %s307
      %p311 = scmp.eq.s32.totalorder %s35, 0
      %p312 = por %p310, %p311
      %p313 = scmp.ne.s32.totalorder %s305, %s307
      %p314 = scmp.eq.s32.totalorder %s40, 1
      %p315 = por %p313, %p314
      %p316 = scmp.ne.s32.totalorder %s307, %s308
      %p317 = scmp.eq.s32.totalorder %s40, 0
      %p318 = por %p316, %p317
      %p319 = scmp.ne.s32.totalorder %s307, %s308
      %p320 = scmp.eq.s32.totalorder %s41, 1
      %p321 = por %p319, %p320
      %p323 = scmp.ne.s32.totalorder %s308, %s322
      %p324 = scmp.eq.s32.totalorder %s41, 0
      %p325 = por %p323, %p324
      %s327 = sadd.s32 %s326, 1
      %p330 = scmp.eq.s32.totalorder %s35, 1
      %p331 = scmp.ne.s32.totalorder %s326, %s328
      %p332 = scmp.eq.s32.totalorder %s35, 0
      %p333 = por %p331, %p332
      %p334 = scmp.ne.s32.totalorder %s326, %s328
      %p335 = scmp.eq.s32.totalorder %s40, 1
      %p336 = por %p334, %p335
      %p337 = scmp.ne.s32.totalorder %s328, %s329
      %p338 = scmp.eq.s32.totalorder %s40, 0
      %p339 = por %p337, %p338
      %p340 = scmp.ne.s32.totalorder %s328, %s329
      %p341 = scmp.eq.s32.totalorder %s41, 1
      %p342 = por %p340, %p341
      %p344 = scmp.ne.s32.totalorder %s329, %s343
      %p345 = scmp.eq.s32.totalorder %s41, 0
      %p346 = por %p344, %p345
      %s348 = sadd.s32 %s347, 1
      %p351 = scmp.eq.s32.totalorder %s35, 1
      %p352 = scmp.ne.s32.totalorder %s347, %s349
      %p353 = scmp.eq.s32.totalorder %s35, 0
      %p354 = por %p352, %p353
      %p355 = scmp.ne.s32.totalorder %s347, %s349
      %p356 = scmp.eq.s32.totalorder %s40, 1
      %p357 = por %p355, %p356
      %p358 = scmp.ne.s32.totalorder %s349, %s350
      %p359 = scmp.eq.s32.totalorder %s40, 0
      %p360 = por %p358, %p359
      %p361 = scmp.ne.s32.totalorder %s349, %s350
      %p362 = scmp.eq.s32.totalorder %s41, 1
      %p363 = por %p361, %p362
      %p365 = scmp.ne.s32.totalorder %s350, %s364
      %p366 = scmp.eq.s32.totalorder %s41, 0
      %p367 = por %p365, %p366
      %s369 = sadd.s32 %s368, 1
      %p372 = scmp.eq.s32.totalorder %s35, 1
      %p373 = scmp.ne.s32.totalorder %s368, %s370
      %p374 = scmp.eq.s32.totalorder %s35, 0
      %p375 = por %p373, %p374
      %p376 = scmp.ne.s32.totalorder %s368, %s370
      %p377 = scmp.eq.s32.totalorder %s40, 1
      %p378 = por %p376, %p377
      %p379 = scmp.ne.s32.totalorder %s370, %s371
      %p380 = scmp.eq.s32.totalorder %s40, 0
      %p381 = por %p379, %p380
      %p382 = scmp.ne.s32.totalorder %s370, %s371
      %p383 = scmp.eq.s32.totalorder %s41, 1
      %p384 = por %p382, %p383
      %p386 = scmp.ne.s32.totalorder %s371, %s385
      %p387 = scmp.eq.s32.totalorder %s41, 0
      %p388 = por %p386, %p387
      %s390 = sadd.s32 %s389, 1
      %p393 = scmp.eq.s32.totalorder %s35, 1
      %p394 = scmp.ne.s32.totalorder %s389, %s391
      %p395 = scmp.eq.s32.totalorder %s35, 0
      %p396 = por %p394, %p395
      %p397 = scmp.ne.s32.totalorder %s389, %s391
      %p398 = scmp.eq.s32.totalorder %s40, 1
      %p399 = por %p397, %p398
      %p400 = scmp.ne.s32.totalorder %s391, %s392
      %p401 = scmp.eq.s32.totalorder %s40, 0
      %p402 = por %p400, %p401
      %p403 = scmp.ne.s32.totalorder %s391, %s392
      %p404 = scmp.eq.s32.totalorder %s41, 1
      %p405 = por %p403, %p404
      %p407 = scmp.ne.s32.totalorder %s392, %s406
      %p408 = scmp.eq.s32.totalorder %s41, 0
      %p409 = por %p407, %p408
      %s411 = sadd.s32 %s410, 1
      %p414 = scmp.eq.s32.totalorder %s35, 1
      %p415 = scmp.ne.s32.totalorder %s410, %s412
      %p416 = scmp.eq.s32.totalorder %s35, 0
      %p417 = por %p415, %p416
      %p418 = scmp.ne.s32.totalorder %s410, %s412
      %p419 = scmp.eq.s32.totalorder %s40, 1
      %p420 = por %p418, %p419
      %p421 = scmp.ne.s32.totalorder %s412, %s413
      %p422 = scmp.eq.s32.totalorder %s40, 0
      %p423 = por %p421, %p422
      %p424 = scmp.ne.s32.totalorder %s412, %s413
      %p425 = scmp.eq.s32.totalorder %s41, 1
      %p426 = por %p424, %p425
      %p428 = scmp.ne.s32.totalorder %s413, %s427
      %p429 = scmp.eq.s32.totalorder %s41, 0
      %p430 = por %p428, %p429
      %s432 = sadd.s32 %s431, 1
      %p435 = scmp.eq.s32.totalorder %s35, 1
      %p436 = scmp.ne.s32.totalorder %s431, %s433
      %p437 = scmp.eq.s32.totalorder %s35, 0
      %p438 = por %p436, %p437
      %p439 = scmp.ne.s32.totalorder %s431, %s433
      %p440 = scmp.eq.s32.totalorder %s40, 1
      %p441 = por %p439, %p440
      %p442 = scmp.ne.s32.totalorder %s433, %s434
      %p443 = scmp.eq.s32.totalorder %s40, 0
      %p444 = por %p442, %p443
      %p445 = scmp.ne.s32.totalorder %s433, %s434
      %p446 = scmp.eq.s32.totalorder %s41, 1
      %p447 = por %p445, %p446
      %p449 = scmp.ne.s32.totalorder %s434, %s448
      %p450 = scmp.eq.s32.totalorder %s41, 0
      %p451 = por %p449, %p450
      %s453 = sadd.s32 %s452, 1
      %p456 = scmp.eq.s32.totalorder %s35, 1
      %p457 = scmp.ne.s32.totalorder %s452, %s454
      %p458 = scmp.eq.s32.totalorder %s35, 0
      %p459 = por %p457, %p458
      %p460 = scmp.ne.s32.totalorder %s452, %s454
      %p461 = scmp.eq.s32.totalorder %s40, 1
      %p462 = por %p460, %p461
      %p463 = scmp.ne.s32.totalorder %s454, %s455
      %p464 = scmp.eq.s32.totalorder %s40, 0
      %p465 = por %p463, %p464
      %p466 = scmp.ne.s32.totalorder %s454, %s455
      %p467 = scmp.eq.s32.totalorder %s41, 1
      %p468 = por %p466, %p467
      %p470 = scmp.ne.s32.totalorder %s455, %s469
      %p471 = scmp.eq.s32.totalorder %s41, 0
      %p472 = por %p470, %p471
      %s474 = sadd.s32 %s473, 1
      %p477 = scmp.eq.s32.totalorder %s35, 1
      %p478 = scmp.ne.s32.totalorder %s473, %s475
      %p479 = scmp.eq.s32.totalorder %s35, 0
      %p480 = por %p478, %p479
      %p481 = scmp.ne.s32.totalorder %s473, %s475
      %p482 = scmp.eq.s32.totalorder %s40, 1
      %p483 = por %p481, %p482
      %p484 = scmp.ne.s32.totalorder %s475, %s476
      %p485 = scmp.eq.s32.totalorder %s40, 0
      %p486 = por %p484, %p485
      %p487 = scmp.ne.s32.totalorder %s475, %s476
      %p488 = scmp.eq.s32.totalorder %s41, 1
      %p489 = por %p487, %p488
      %p491 = scmp.ne.s32.totalorder %s476, %s490
      %p492 = scmp.eq.s32.totalorder %s41, 0
      %p493 = por %p491, %p492
      %s495 = sadd.s32 %s494, 1
      %p498 = scmp.eq.s32.totalorder %s35, 1
      %p499 = scmp.ne.s32.totalorder %s494, %s496
      %p500 = scmp.eq.s32.totalorder %s35, 0
      %p501 = por %p499, %p500
      %p502 = scmp.ne.s32.totalorder %s494, %s496
      %p503 = scmp.eq.s32.totalorder %s40, 1
      %p504 = por %p502, %p503
      %p505 = scmp.ne.s32.totalorder %s496, %s497
      %p506 = scmp.eq.s32.totalorder %s40, 0
      %p507 = por %p505, %p506
      %p508 = scmp.ne.s32.totalorder %s496, %s497
      %p509 = scmp.eq.s32.totalorder %s41, 1
      %p510 = por %p508, %p509
      %p512 = scmp.ne.s32.totalorder %s497, %s511
      %p513 = scmp.eq.s32.totalorder %s41, 0
      %p514 = por %p512, %p513
      %s516 = sadd.s32 %s515, 1
      %p519 = scmp.eq.s32.totalorder %s35, 1
      %p520 = scmp.ne.s32.totalorder %s515, %s517
      %p521 = scmp.eq.s32.totalorder %s35, 0
      %p522 = por %p520, %p521
      %p523 = scmp.ne.s32.totalorder %s515, %s517
      %p524 = scmp.eq.s32.totalorder %s40, 1
      %p525 = por %p523, %p524
      %p526 = scmp.ne.s32.totalorder %s517, %s518
      %p527 = scmp.eq.s32.totalorder %s40, 0
      %p528 = por %p526, %p527
      %p529 = scmp.ne.s32.totalorder %s517, %s518
      %p530 = scmp.eq.s32.totalorder %s41, 1
      %p531 = por %p529, %p530
      %p533 = scmp.ne.s32.totalorder %s518, %s532
      %p534 = scmp.eq.s32.totalorder %s41, 0
      %p535 = por %p533, %p534
      %s536 = ssub.s32 %s35, %s42
      %p537 = scmp.eq.s32.totalorder %s536, 0
      %s539 = sadd.s32 %s538, 1
      %s540 = scalar_select %p537, %s538, %s539
      %p543 = pneg %p537
      %p544 = scmp.eq.s32.totalorder %s35, 1
      %p545 = por %p543, %p544
      %p546 = scmp.ne.s32.totalorder %s538, %s541
      %p547 = scmp.eq.s32.totalorder %s35, 0
      %p548 = por %p546, %p547
      %p549 = scmp.ne.s32.totalorder %s538, %s541
      %p550 = scmp.eq.s32.totalorder %s40, 1
      %p551 = por %p549, %p550
      %p552 = scmp.ne.s32.totalorder %s541, %s542
      %p553 = scmp.eq.s32.totalorder %s40, 0
      %p554 = por %p552, %p553
      %p555 = scmp.ne.s32.totalorder %s541, %s542
      %p556 = scmp.eq.s32.totalorder %s41, 1
      %p557 = por %p555, %p556
      %p559 = scmp.ne.s32.totalorder %s542, %s558
      %p560 = scmp.eq.s32.totalorder %s41, 0
      %p561 = por %p559, %p560
      %s562 = ssub.s32 %s35, %s42
      %p563 = scmp.eq.s32.totalorder %s562, 0
      %s565 = sadd.s32 %s564, 1
      %s566 = scalar_select %p563, %s564, %s565
      %p569 = pneg %p563
      %p570 = scmp.eq.s32.totalorder %s35, 1
      %p571 = por %p569, %p570
      %p572 = scmp.ne.s32.totalorder %s564, %s567
      %p573 = scmp.eq.s32.totalorder %s35, 0
      %p574 = por %p572, %p573
      %p575 = scmp.ne.s32.totalorder %s564, %s567
      %p576 = scmp.eq.s32.totalorder %s40, 1
      %p577 = por %p575, %p576
      %p578 = scmp.ne.s32.totalorder %s567, %s568
      %p579 = scmp.eq.s32.totalorder %s40, 0
      %p580 = por %p578, %p579
      %p581 = scmp.ne.s32.totalorder %s567, %s568
      %p582 = scmp.eq.s32.totalorder %s41, 1
      %p583 = por %p581, %p582
      %p585 = scmp.ne.s32.totalorder %s568, %s584
      %p586 = scmp.eq.s32.totalorder %s41, 0
      %p587 = por %p585, %p586
      %p588 = scmp.le.s32.totalorder 1, %s35
      %p589 = scmp.lt.s32.totalorder %s35, 3
      %p590 = pnand %p588, %p589
      %p591 = pneg %p590
      // Predicated region
      $region9: #{mrc_forward_pallas.1} parent=5 // pred_check
        _
      $region10: #{mrc_forward_pallas.1} parent=5 // pred_check_branch
        %593 = sbr.rel (%p590) target = $region12
      $region11: #{mrc_forward_pallas.1} parent=5 // pred_region
        %s594 = ssub.s32 %s35, 1
        // Predicated region
        $region13: #{mrc_forward_pallas.1} parent=11 // pred_check
          %p595 = pneg %p108
        $region14: #{mrc_forward_pallas.1} parent=11 // pred_check_branch
          %597 = sbr.rel (%p595) target = $region16
        $region15: #{mrc_forward_pallas.1} parent=11 // pred_region
          _
        $region16: #{mrc_forward_pallas.1} parent=11 // pred_fallthru
          _
        // Predicated region
        $region17: #{mrc_forward_pallas.1} parent=11 // pred_check
          %p598 = pneg %p129
        $region18: #{mrc_forward_pallas.1} parent=11 // pred_check_branch
          %600 = sbr.rel (%p598) target = $region20
        $region19: #{mrc_forward_pallas.1} parent=11 // pred_region
          _
        $region20: #{mrc_forward_pallas.1} parent=11 // pred_fallthru
          _
        // Predicated region
        $region21: #{mrc_forward_pallas.1} parent=11 // pred_check
          %p601 = pneg %p150
        $region22: #{mrc_forward_pallas.1} parent=11 // pred_check_branch
          %603 = sbr.rel (%p601) target = $region24
        $region23: #{mrc_forward_pallas.1} parent=11 // pred_region
          _
        $region24: #{mrc_forward_pallas.1} parent=11 // pred_fallthru
          _
        // Predicated region
        $region25: #{mrc_forward_pallas.1} parent=11 // pred_check
          %p604 = pneg %p171
        $region26: #{mrc_forward_pallas.1} parent=11 // pred_check_branch
          %606 = sbr.rel (%p604) target = $region28
        $region27: #{mrc_forward_pallas.1} parent=11 // pred_region
          _
        $region28: #{mrc_forward_pallas.1} parent=11 // pred_fallthru
          _
        // Predicated region
        $region29: #{mrc_forward_pallas.1} parent=11 // pred_check
          %p607 = pneg %p192
        $region30: #{mrc_forward_pallas.1} parent=11 // pred_check_branch
          %609 = sbr.rel (%p607) target = $region32
        $region31: #{mrc_forward_pallas.1} parent=11 // pred_region
          _
        $region32: #{mrc_forward_pallas.1} parent=11 // pred_fallthru
          _
        // Predicated region
        $region33: #{mrc_forward_pallas.1} parent=11 // pred_check
          %p610 = pneg %p213
        $region34: #{mrc_forward_pallas.1} parent=11 // pred_check_branch
          %612 = sbr.rel (%p610) target = $region36
        $region35: #{mrc_forward_pallas.1} parent=11 // pred_region
          _
        $region36: #{mrc_forward_pallas.1} parent=11 // pred_fallthru
          _
        // Predicated region
        $region37: #{mrc_forward_pallas.1} parent=11 // pred_check
          %p613 = pneg %p234
        $region38: #{mrc_forward_pallas.1} parent=11 // pred_check_branch
          %615 = sbr.rel (%p613) target = $region40
        $region39: #{mrc_forward_pallas.1} parent=11 // pred_region
          _
        $region40: #{mrc_forward_pallas.1} parent=11 // pred_fallthru
          _
        // Predicated region
        $region41: #{mrc_forward_pallas.1} parent=11 // pred_check
          %p616 = pneg %p255
        $region42: #{mrc_forward_pallas.1} parent=11 // pred_check_branch
          %618 = sbr.rel (%p616) target = $region44
        $region43: #{mrc_forward_pallas.1} parent=11 // pred_region
          _
        $region44: #{mrc_forward_pallas.1} parent=11 // pred_fallthru
          _
        // Predicated region
        $region45: #{mrc_forward_pallas.1} parent=11 // pred_check
          %p619 = pneg %p276
        $region46: #{mrc_forward_pallas.1} parent=11 // pred_check_branch
          %621 = sbr.rel (%p619) target = $region48
        $region47: #{mrc_forward_pallas.1} parent=11 // pred_region
          _
        $region48: #{mrc_forward_pallas.1} parent=11 // pred_fallthru
          _
        // Predicated region
        $region49: #{mrc_forward_pallas.1} parent=11 // pred_check
          %p622 = pneg %p297
        $region50: #{mrc_forward_pallas.1} parent=11 // pred_check_branch
          %624 = sbr.rel (%p622) target = $region52
        $region51: #{mrc_forward_pallas.1} parent=11 // pred_region
          _
        $region52: #{mrc_forward_pallas.1} parent=11 // pred_fallthru
          _
        // Predicated region
        $region53: #{mrc_forward_pallas.1} parent=11 // pred_check
          %p625 = pneg %p318
        $region54: #{mrc_forward_pallas.1} parent=11 // pred_check_branch
          %627 = sbr.rel (%p625) target = $region56
        $region55: #{mrc_forward_pallas.1} parent=11 // pred_region
          _
        $region56: #{mrc_forward_pallas.1} parent=11 // pred_fallthru
          _
        // Predicated region
        $region57: #{mrc_forward_pallas.1} parent=11 // pred_check
          %p628 = pneg %p339
        $region58: #{mrc_forward_pallas.1} parent=11 // pred_check_branch
          %630 = sbr.rel (%p628) target = $region60
        $region59: #{mrc_forward_pallas.1} parent=11 // pred_region
          _
        $region60: #{mrc_forward_pallas.1} parent=11 // pred_fallthru
          _
        // Predicated region
        $region61: #{mrc_forward_pallas.1} parent=11 // pred_check
          %p631 = pneg %p360
        $region62: #{mrc_forward_pallas.1} parent=11 // pred_check_branch
          %633 = sbr.rel (%p631) target = $region64
        $region63: #{mrc_forward_pallas.1} parent=11 // pred_region
          _
        $region64: #{mrc_forward_pallas.1} parent=11 // pred_fallthru
          _
        // Predicated region
        $region65: #{mrc_forward_pallas.1} parent=11 // pred_check
          %p634 = pneg %p381
        $region66: #{mrc_forward_pallas.1} parent=11 // pred_check_branch
          %636 = sbr.rel (%p634) target = $region68
        $region67: #{mrc_forward_pallas.1} parent=11 // pred_region
          _
        $region68: #{mrc_forward_pallas.1} parent=11 // pred_fallthru
          _
        // Predicated region
        $region69: #{mrc_forward_pallas.1} parent=11 // pred_check
          %p637 = pneg %p402
        $region70: #{mrc_forward_pallas.1} parent=11 // pred_check_branch
          %639 = sbr.rel (%p637) target = $region72
        $region71: #{mrc_forward_pallas.1} parent=11 // pred_region
          _
        $region72: #{mrc_forward_pallas.1} parent=11 // pred_fallthru
          _
        // Predicated region
        $region73: #{mrc_forward_pallas.1} parent=11 // pred_check
          %p640 = pneg %p423
        $region74: #{mrc_forward_pallas.1} parent=11 // pred_check_branch
          %642 = sbr.rel (%p640) target = $region76
        $region75: #{mrc_forward_pallas.1} parent=11 // pred_region
          _
        $region76: #{mrc_forward_pallas.1} parent=11 // pred_fallthru
          _
        // Predicated region
        $region77: #{mrc_forward_pallas.1} parent=11 // pred_check
          %p643 = pneg %p444
        $region78: #{mrc_forward_pallas.1} parent=11 // pred_check_branch
          %645 = sbr.rel (%p643) target = $region80
        $region79: #{mrc_forward_pallas.1} parent=11 // pred_region
          _
        $region80: #{mrc_forward_pallas.1} parent=11 // pred_fallthru
          _
        // Predicated region
        $region81: #{mrc_forward_pallas.1} parent=11 // pred_check
          %p646 = pneg %p465
        $region82: #{mrc_forward_pallas.1} parent=11 // pred_check_branch
          %648 = sbr.rel (%p646) target = $region84
        $region83: #{mrc_forward_pallas.1} parent=11 // pred_region
          _
        $region84: #{mrc_forward_pallas.1} parent=11 // pred_fallthru
          _
        // Predicated region
        $region85: #{mrc_forward_pallas.1} parent=11 // pred_check
          %p649 = pneg %p486
        $region86: #{mrc_forward_pallas.1} parent=11 // pred_check_branch
          %651 = sbr.rel (%p649) target = $region88
        $region87: #{mrc_forward_pallas.1} parent=11 // pred_region
          _
        $region88: #{mrc_forward_pallas.1} parent=11 // pred_fallthru
          _
        // Predicated region
        $region89: #{mrc_forward_pallas.1} parent=11 // pred_check
          %p652 = pneg %p507
        $region90: #{mrc_forward_pallas.1} parent=11 // pred_check_branch
          %654 = sbr.rel (%p652) target = $region92
        $region91: #{mrc_forward_pallas.1} parent=11 // pred_region
          _
        $region92: #{mrc_forward_pallas.1} parent=11 // pred_fallthru
          _
        // Predicated region
        $region93: #{mrc_forward_pallas.1} parent=11 // pred_check
          %p655 = pneg %p528
        $region94: #{mrc_forward_pallas.1} parent=11 // pred_check_branch
          %657 = sbr.rel (%p655) target = $region96
        $region95: #{mrc_forward_pallas.1} parent=11 // pred_region
          _
        $region96: #{mrc_forward_pallas.1} parent=11 // pred_fallthru
          _
      $region12: #{mrc_forward_pallas.1} parent=5 // pred_fallthru
        _
      %p658 = scmp.lt.s32.totalorder %s35, 2
      // Predicated region
      $region97: #{mrc_forward_pallas.1} parent=5 // pred_check
        %p659 = pneg %p658
      $region98: #{mrc_forward_pallas.1} parent=5 // pred_check_branch
        %661 = sbr.rel (%p659) target = $region100
      $region99: #{mrc_forward_pallas.1} parent=5 // pred_region
        // Predicated region
        $region101: #{mrc_forward_pallas.1} parent=99 // pred_check
          %p662 = pneg %p55
        $region102: #{mrc_forward_pallas.1} parent=99 // pred_check_branch
          %664 = sbr.rel (%p662) target = $region104
        $region103: #{mrc_forward_pallas.1} parent=99 // pred_region
          %p665 = scmp.lt.s32.totalorder %s35, 1
          %s666 = scalar_select %p665, %s35, 1
          %s667 = smul.addr %s666, 8
          %s668 = scalar_lea.vmem %s0, %s667
        $region104: #{mrc_forward_pallas.1} parent=99 // pred_fallthru
          _
        // Predicated region
        $region105: #{mrc_forward_pallas.1} parent=99 // pred_check
          %p669 = pneg %p81
        $region106: #{mrc_forward_pallas.1} parent=99 // pred_check_branch
          %671 = sbr.rel (%p669) target = $region108
        $region107: #{mrc_forward_pallas.1} parent=99 // pred_region
          %p672 = scmp.lt.s32.totalorder %s35, 1
          %s673 = scalar_select %p672, %s35, 1
          %s674 = scalar_lea.vmem %s1, %s673
        $region108: #{mrc_forward_pallas.1} parent=99 // pred_fallthru
          _
      $region100: #{mrc_forward_pallas.1} parent=5 // pred_fallthru
        _
      %p675 = scmp.le.s32.totalorder 1, %s35
      %p676 = scmp.lt.s32.totalorder %s35, 3
      %p677 = pnand %p675, %p676
      %p678 = pneg %p677
      // Predicated region
      $region109: #{mrc_forward_pallas.1} parent=5 // pred_check
        _
      $region110: #{mrc_forward_pallas.1} parent=5 // pred_check_branch
        %680 = sbr.rel (%p677) target = $region112
      $region111: #{mrc_forward_pallas.1} parent=5 // pred_region
        %s681 = ssub.s32 %s35, 1
        %p682 = scmp.lt.s32.totalorder %s40, 1
        %s683 = scalar_select %p682, %s40, 1
        %s684 = smul.addr %s683, 8
        %s685 = scalar_lea.vmem %s0, %s684
        %p686 = pneg %p61
        %p687 = pneg %p58
        %p688 = scmp.lt.s32.totalorder %s40, 1
        %s689 = scalar_select %p688, %s40, 1
        %s690 = scalar_lea.vmem %s1, %s689
        %p691 = pneg %p87
        %p692 = pneg %p84
        %p693 = pneg %p108
        %p694 = pneg %p105
        %p695 = pneg %p129
        %p696 = pneg %p126
        %p697 = pneg %p150
        %p698 = pneg %p147
        %p699 = pneg %p171
        %p700 = pneg %p168
        %p701 = pneg %p192
        %p702 = pneg %p189
        %p703 = pneg %p213
        %p704 = pneg %p210
        %p705 = pneg %p234
        %p706 = pneg %p231
        %p707 = pneg %p255
        %p708 = pneg %p252
        %p709 = pneg %p276
        %p710 = pneg %p273
        %p711 = pneg %p297
        %p712 = pneg %p294
        %p713 = pneg %p318
        %p714 = pneg %p315
        %p715 = pneg %p339
        %p716 = pneg %p336
        %p717 = pneg %p360
        %p718 = pneg %p357
        %p719 = pneg %p381
        %p720 = pneg %p378
        %p721 = pneg %p402
        %p722 = pneg %p399
        %p723 = pneg %p423
        %p724 = pneg %p420
        %p725 = pneg %p444
        %p726 = pneg %p441
        %p727 = pneg %p465
        %p728 = pneg %p462
        %p729 = pneg %p486
        %p730 = pneg %p483
        %p731 = pneg %p507
        %p732 = pneg %p504
        %p733 = pneg %p528
        %p734 = pneg %p525
        %p735 = pneg %p554
        %p736 = pneg %p551
        %s737 = sand.u32 %s541, 1
        %s738 = scalar_lea.sflag [#allocation4], %s737
        %s739 = sand.u32 %s541, 1
        %s740 = smul.addr %s739, 8
        %s741 = scalar_lea.vmem [#allocation3], %s740
        %p742 = pneg %p580
        %p743 = pneg %p577
        %p744 = scmp.lt.s32.totalorder %s40, 1
        %s745 = scalar_select %p744, %s40, 1
        %s746 = smul.addr %s745, 8
        %s747 = scalar_lea.vmem %s24, %s746
        %p748 = scmp.lt.s32.totalorder %s40, 1
        %s749 = scalar_select %p748, %s40, 1
        %s750 = smul.addr %s749, 8
        %s751 = scalar_lea.vmem %s0, %s750
        %p752 = scmp.lt.s32.totalorder %s40, 1
        %s753 = scalar_select %p752, %s40, 1
        %s754 = scalar_lea.vmem %s1, %s753
        %p755 = scmp.lt.s32.totalorder %s40, 1
        %s756 = scalar_select %p755, %s40, 1
        %s757 = smul.addr %s756, 8
        %s758 = scalar_lea.vmem %s24, %s757
        %v759 = vld [vmem:[%s751] sm:$0xff]
        %v760 = vld [vmem:[%s2] sm:$0x1]
        %v761 = vld [vmem:[%s3] sm:$0x1]
        %vm762 = vcmask 261120
        %v763 = vsel %vm762, %v759, 0.0
        %764 = vadd.xlane.f32.xlu0 %v763
        %v765 = vpop.xlane.xlu0 %764
        %v766 = vrcp.pop 32.0
        %v767 = vmul.f32 32.0, %v766
        %v768 = vsub.f32 1.0, %v767
        %v769 = vmul.f32 %v766, %v768
        %v770 = vadd.f32 %v766, %v769
        %vm771 = vweird.f32 %v766
        %v772 = vsel %vm771, %v766, %v770
        %v773 = vmul.f32 %v765, %v772
        %v774 = vsub.f32 %v759, %v773
        %v775 = vmul.f32 %v774, %v774
        %v776 = vsel %vm762, %v775, 0.0
        %777 = vadd.xlane.f32.xlu0 %v776
        %v778 = vpop.xlane.xlu0 %777
        %v779 = vmul.f32 %v778, %v772
        %v780 = vadd.f32 %v779, 1e-12
        %v781 = vrsqrt.pop %v780
        %v782 = vmul.f32 %v781, %v780
        %v783 = vmul.f32 %v782, %v781
        %v784 = vmul.f32 0.5, %v783
        %v785 = vsub.f32 1.5, %v784
        %v786 = vmul.f32 %v781, %v785
        %vm787 = vweird.f32 %v780
        %vm788 = vweird.f32 %v781
        %vm789 = vmor %vm787, %vm788
        %v790 = vsel %vm789, %v781, %v786
        %v791 = vmul.f32 %v774, %v790
        %v793 = vperm.slane %v760, 0
        %v795 = vmul.f32 %v791, %v793
        %v797 = vperm.slane %v761, 0
        %v799 = vadd.f32 %v795, %v797
        %v800 = vld [vmem:[%s754] sm:$0x1]
        %v801 = vsub.f32 1.0, %v800
        %v802 = vmul.f32 %v801, -1e+09
        %v803 = vld [vmem:[%s4] sm:$0xff]
        %v804 = vld [vmem:[%s4 + $0x8] sm:$0xff]
        %v805 = vld [vmem:[%s4 + $0x10] sm:$0xff]
        %v806 = vld [vmem:[%s4 + $0x18] sm:$0xff]
        %v807 = vld [vmem:[%s5] sm:$0x1]
        %v809 = vperm.slane %v807, 0
        %v812 = vsel %vm762, %v799, 0
        %814 = vmatpush.msra.mxu0 0.0
        %815 = vmatpush.msra.mxu0 0.0
        %816 = vmatpush.msra.mxu0 0.0
        %817 = vmatpush.msra.mxu0 0.0
        %818 = vmatpush.msra.mxu0 0.0
        %819 = vmatpush.msra.mxu0 0.0
        %820 = vmatpush.msra.mxu0 0.0
        %821 = vmatpush.msra.mxu0 0.0
        %822 = vmatpush.msra.mxu0 0.0
        %823 = vmatpush.msra.mxu0 0.0
        %824 = vmatpush.msra.mxu0 0.0
        %825 = vmatpush.msra.mxu0 0.0
        %826 = vmatpush.msra.mxu0 %v806
        %827 = vmatpush.msra.mxu0 %v805
        %828 = vmatpush.msra.mxu0 %v804
        %829 = vmatpush.msra.mxu0 %v803
        %830 = vmatmul.f32.gmra.mxu0 %v812
        %v831 = vpop.f32.mrf.mxu0
        %v832 = vadd.f32 %v809, %v831
        %833 = vdwg.mxu0
        %835 = vrot.lane.b32.xlu0 %v832, 96
        %v836 = vpop.permute.xlu0 %835
        %vm837 = vcmask 130048
        %v838 = vsel %vm837, %v832, 0
        %v840 = vsel %vm837, %v836, 0
        %842 = vmatpush.xpose.msra.mxu0 0.0
        %843 = vmatpush.xpose.msra.mxu0 0.0
        %844 = vmatpush.xpose.msra.mxu0 0.0
        %845 = vmatpush.xpose.msra.mxu0 0.0
        %846 = vmatpush.xpose.msra.mxu0 0.0
        %847 = vmatpush.xpose.msra.mxu0 0.0
        %848 = vmatpush.xpose.msra.mxu0 0.0
        %849 = vmatpush.xpose.msra.mxu0 0.0
        %850 = vmatpush.xpose.msra.mxu0 0.0
        %851 = vmatpush.xpose.msra.mxu0 0.0
        %852 = vmatpush.xpose.msra.mxu0 0.0
        %853 = vmatpush.xpose.msra.mxu0 0.0
        %854 = vmatpush.xpose.msra.mxu0 0.0
        %855 = vmatpush.xpose.msra.mxu0 0.0
        %856 = vmatpush.xpose.msra.mxu0 0.0
        %857 = vmatpush.xpose.msra.mxu0 %v840
        %858 = vmatmul.f32.gmra.mxu0 %v838
        %v859 = vpop.f32.mrf.mxu0
        %v860 = vadd.f32 0.0, %v859
        %861 = vdwg.mxu0
        %v862 = vmul.f32 %v860, 0.25
        %v864 = vperm.slane %v802, 0
        %v866 = vadd.f32 %v862, %v864
        %vm867 = vcmask 64512
        %v868 = vsel %vm867, %v866, -inf
        %869 = vmax.xlane.f32.xlu0 %v868
        %v870 = vpop.xlane.xlu0 %869
        %v871 = vsub.f32 %v866, %v870
        %v872 = vmul.f32 %v871, 1.442695
        %v873 = vpow.pop %v872
        %v874 = vsel %vm867, %v873, 0.0
        %875 = vadd.xlane.f32.xlu0 %v874
        %v876 = vpop.xlane.xlu0 %875
        %v877 = vrcp.pop %v876
        %v878 = vmul.f32 %v873, %v877
        %879 = vrot.lane.b32.xlu0 %v832, 64
        %v880 = vpop.permute.xlu0 %879
        %v883 = vsel %vm867, %v878, 0
        %885 = vmatpush.msra.mxu0 0.0
        %886 = vmatpush.msra.mxu0 0.0
        %887 = vmatpush.msra.mxu0 0.0
        %888 = vmatpush.msra.mxu0 0.0
        %889 = vmatpush.msra.mxu0 0.0
        %890 = vmatpush.msra.mxu0 0.0
        %891 = vmatpush.msra.mxu0 0.0
        %892 = vmatpush.msra.mxu0 0.0
        %893 = vmatpush.msra.mxu0 0.0
        %894 = vmatpush.msra.mxu0 0.0
        %895 = vmatpush.msra.mxu0 0.0
        %896 = vmatpush.msra.mxu0 0.0
        %897 = vmatpush.msra.mxu0 0.0
        %898 = vmatpush.msra.mxu0 0.0
        %899 = vmatpush.msra.mxu0 0.0
        %900 = vmatpush.msra.mxu0 %v880
        %901 = vmatmul.f32.gmra.mxu0 %v883
        %v902 = vpop.f32.mrf.mxu0
        %v903 = vadd.f32 0.0, %v902
        %904 = vdwg.mxu0
        %905 = vrot.lane.b32.xlu0 %v832, 112
        %v906 = vpop.permute.xlu0 %905
        %907 = vrot.lane.b32.xlu0 %v832, 80
        %v908 = vpop.permute.xlu0 %907
        %v909 = vsel %vm837, %v906, 0
        %v911 = vsel %vm837, %v908, 0
        %913 = vmatpush.xpose.msra.mxu0 0.0
        %914 = vmatpush.xpose.msra.mxu0 0.0
        %915 = vmatpush.xpose.msra.mxu0 0.0
        %916 = vmatpush.xpose.msra.mxu0 0.0
        %917 = vmatpush.xpose.msra.mxu0 0.0
        %918 = vmatpush.xpose.msra.mxu0 0.0
        %919 = vmatpush.xpose.msra.mxu0 0.0
        %920 = vmatpush.xpose.msra.mxu0 0.0
        %921 = vmatpush.xpose.msra.mxu0 0.0
        %922 = vmatpush.xpose.msra.mxu0 0.0
        %923 = vmatpush.xpose.msra.mxu0 0.0
        %924 = vmatpush.xpose.msra.mxu0 0.0
        %925 = vmatpush.xpose.msra.mxu0 0.0
        %926 = vmatpush.xpose.msra.mxu0 0.0
        %927 = vmatpush.xpose.msra.mxu0 0.0
        %928 = vmatpush.xpose.msra.mxu0 %v911
        %929 = vmatmul.f32.gmra.mxu0 %v909
        %v930 = vpop.f32.mrf.mxu0
        %v931 = vadd.f32 0.0, %v930
        %932 = vdwg.mxu0
        %v933 = vmul.f32 %v931, 0.25
        %v934 = vadd.f32 %v933, %v864
        %v935 = vsel %vm867, %v934, -inf
        %936 = vmax.xlane.f32.xlu0 %v935
        %v937 = vpop.xlane.xlu0 %936
        %v938 = vsub.f32 %v934, %v937
        %v939 = vmul.f32 %v938, 1.442695
        %v940 = vpow.pop %v939
        %v941 = vsel %vm867, %v940, 0.0
        %942 = vadd.xlane.f32.xlu0 %v941
        %v943 = vpop.xlane.xlu0 %942
        %v944 = vrcp.pop %v943
        %v945 = vmul.f32 %v940, %v944
        %946 = vrot.lane.b32.xlu0 %v832, 48
        %v947 = vpop.permute.xlu0 %946
        %v950 = vsel %vm867, %v945, 0
        %952 = vmatpush.msra.mxu0 0.0
        %953 = vmatpush.msra.mxu0 0.0
        %954 = vmatpush.msra.mxu0 0.0
        %955 = vmatpush.msra.mxu0 0.0
        %956 = vmatpush.msra.mxu0 0.0
        %957 = vmatpush.msra.mxu0 0.0
        %958 = vmatpush.msra.mxu0 0.0
        %959 = vmatpush.msra.mxu0 0.0
        %960 = vmatpush.msra.mxu0 0.0
        %961 = vmatpush.msra.mxu0 0.0
        %962 = vmatpush.msra.mxu0 0.0
        %963 = vmatpush.msra.mxu0 0.0
        %964 = vmatpush.msra.mxu0 0.0
        %965 = vmatpush.msra.mxu0 0.0
        %966 = vmatpush.msra.mxu0 0.0
        %967 = vmatpush.msra.mxu0 %v947
        %968 = vmatmul.f32.gmra.mxu0 %v950
        %v969 = vpop.f32.mrf.mxu0
        %v970 = vadd.f32 0.0, %v969
        %971 = vdwg.mxu0
        %973 = vrot.lane.b32.xlu0 %v970, 16
        %v974 = vpop.permute.xlu0 %973
        %v976 = vsel %vm837, %v903, %v974
        %v977 = vld [vmem:[%s6] sm:$0xff]
        %v978 = vld [vmem:[%s6 + $0x8] sm:$0xff]
        %v979 = vld [vmem:[%s6 + $0x10] sm:$0xff]
        %v980 = vld [vmem:[%s6 + $0x18] sm:$0xff]
        %v981 = vld [vmem:[%s7] sm:$0x1]
        %v983 = vperm.slane %v981, 0
        %v986 = vsel %vm762, %v976, 0
        %988 = vmatpush.msra.mxu0 0.0
        %989 = vmatpush.msra.mxu0 0.0
        %990 = vmatpush.msra.mxu0 0.0
        %991 = vmatpush.msra.mxu0 0.0
        %992 = vmatpush.msra.mxu0 0.0
        %993 = vmatpush.msra.mxu0 0.0
        %994 = vmatpush.msra.mxu0 0.0
        %995 = vmatpush.msra.mxu0 0.0
        %996 = vmatpush.msra.mxu0 0.0
        %997 = vmatpush.msra.mxu0 0.0
        %998 = vmatpush.msra.mxu0 0.0
        %999 = vmatpush.msra.mxu0 0.0
        %1000 = vmatpush.msra.mxu0 %v980
        %1001 = vmatpush.msra.mxu0 %v979
        %1002 = vmatpush.msra.mxu0 %v978
        %1003 = vmatpush.msra.mxu0 %v977
        %1004 = vmatmul.f32.gmra.mxu0 %v986
        %v1005 = vpop.f32.mrf.mxu0
        %v1006 = vadd.f32 %v983, %v1005
        %1007 = vdwg.mxu0
        %v1008 = vadd.f32 %v799, %v1006
        %v1009 = vld [vmem:[%s8] sm:$0x1]
        %v1010 = vld [vmem:[%s9] sm:$0x1]
        %v1011 = vsel %vm762, %v1008, 0.0
        %1012 = vadd.xlane.f32.xlu0 %v1011
        %v1013 = vpop.xlane.xlu0 %1012
        %v1014 = vmul.f32 %v1013, %v772
        %v1015 = vsub.f32 %v1008, %v1014
        %v1016 = vmul.f32 %v1015, %v1015
        %v1017 = vsel %vm762, %v1016, 0.0
        %1018 = vadd.xlane.f32.xlu0 %v1017
        %v1019 = vpop.xlane.xlu0 %1018
        %v1020 = vmul.f32 %v1019, %v772
        %v1021 = vadd.f32 %v1020, 1e-12
        %v1022 = vrsqrt.pop %v1021
        %v1023 = vmul.f32 %v1022, %v1021
        %v1024 = vmul.f32 %v1023, %v1022
        %v1025 = vmul.f32 0.5, %v1024
        %v1026 = vsub.f32 1.5, %v1025
        %v1027 = vmul.f32 %v1022, %v1026
        %vm1028 = vweird.f32 %v1021
        %vm1029 = vweird.f32 %v1022
        %vm1030 = vmor %vm1028, %vm1029
        %v1031 = vsel %vm1030, %v1022, %v1027
        %v1032 = vmul.f32 %v1015, %v1031
        %v1034 = vperm.slane %v1009, 0
        %v1036 = vmul.f32 %v1032, %v1034
        %v1038 = vperm.slane %v1010, 0
        %v1040 = vadd.f32 %v1036, %v1038
        %v1041 = vld [vmem:[%s10] sm:$0xff]
        %v1042 = vld [vmem:[%s10 + $0x8] sm:$0xff]
        %v1043 = vld [vmem:[%s10 + $0x10] sm:$0xff]
        %v1044 = vld [vmem:[%s10 + $0x18] sm:$0xff]
        %v1045 = vld [vmem:[%s11] sm:$0x1]
        %v1047 = vperm.slane %v1045, 0
        %v1050 = vsel %vm762, %v1040, 0
        %1052 = vmatpush.msra.mxu0 0.0
        %1053 = vmatpush.msra.mxu0 0.0
        %1054 = vmatpush.msra.mxu0 0.0
        %1055 = vmatpush.msra.mxu0 0.0
        %1056 = vmatpush.msra.mxu0 0.0
        %1057 = vmatpush.msra.mxu0 0.0
        %1058 = vmatpush.msra.mxu0 0.0
        %1059 = vmatpush.msra.mxu0 0.0
        %1060 = vmatpush.msra.mxu0 0.0
        %1061 = vmatpush.msra.mxu0 0.0
        %1062 = vmatpush.msra.mxu0 0.0
        %1063 = vmatpush.msra.mxu0 0.0
        %1064 = vmatpush.msra.mxu0 %v1044
        %1065 = vmatpush.msra.mxu0 %v1043
        %1066 = vmatpush.msra.mxu0 %v1042
        %1067 = vmatpush.msra.mxu0 %v1041
        %1068 = vmatmul.f32.gmra.mxu0 %v1050
        %v1069 = vpop.f32.mrf.mxu0
        %v1070 = vadd.f32 %v1047, %v1069
        %1071 = vdwg.mxu0
        %v1072 = vmul.f32 %v1070, 0.5
        %v1073 = vmul.f32 %v1070, 0.044715
        %v1074 = vmul.f32 %v1073, %v1070
        %v1075 = vmul.f32 %v1074, %v1070
        %v1076 = vadd.f32 %v1070, %v1075
        %v1077 = vmul.f32 %v1076, 0.7978846
        %v1078 = vtanh.pop %v1077
        %v1079 = vadd.f32 %v1078, 1.0
        %v1080 = vmul.f32 %v1072, %v1079
        %v1081 = vld [vmem:[%s12] sm:$0xff]
        %v1082 = vld [vmem:[%s12 + $0x8] sm:$0xff]
        %v1083 = vld [vmem:[%s12 + $0x10] sm:$0xff]
        %v1084 = vld [vmem:[%s12 + $0x18] sm:$0xff]
        %v1085 = vld [vmem:[%s12 + $0x20] sm:$0xff]
        %v1086 = vld [vmem:[%s12 + $0x28] sm:$0xff]
        %v1087 = vld [vmem:[%s12 + $0x30] sm:$0xff]
        %v1088 = vld [vmem:[%s12 + $0x38] sm:$0xff]
        %v1089 = vld [vmem:[%s13] sm:$0x1]
        %v1091 = vperm.slane %v1089, 0
        %vm1093 = vcmask 523264
        %v1095 = vsel %vm1093, %v1080, 0
        %1097 = vmatpush.msra.mxu0 0.0
        %1098 = vmatpush.msra.mxu0 0.0
        %1099 = vmatpush.msra.mxu0 0.0
        %1100 = vmatpush.msra.mxu0 0.0
        %1101 = vmatpush.msra.mxu0 0.0
        %1102 = vmatpush.msra.mxu0 0.0
        %1103 = vmatpush.msra.mxu0 0.0
        %1104 = vmatpush.msra.mxu0 0.0
        %1105 = vmatpush.msra.mxu0 %v1088
        %1106 = vmatpush.msra.mxu0 %v1087
        %1107 = vmatpush.msra.mxu0 %v1086
        %1108 = vmatpush.msra.mxu0 %v1085
        %1109 = vmatpush.msra.mxu0 %v1084
        %1110 = vmatpush.msra.mxu0 %v1083
        %1111 = vmatpush.msra.mxu0 %v1082
        %1112 = vmatpush.msra.mxu0 %v1081
        %1113 = vmatmul.f32.gmra.mxu0 %v1095
        %v1114 = vpop.f32.mrf.mxu0
        %v1115 = vadd.f32 %v1091, %v1114
        %1116 = vdwg.mxu0
        %v1117 = vadd.f32 %v1040, %v1115
        %v1118 = vld [vmem:[%s14] sm:$0x1]
        %v1119 = vld [vmem:[%s15] sm:$0x1]
        %v1120 = vsel %vm762, %v1117, 0.0
        %1121 = vadd.xlane.f32.xlu0 %v1120
        %v1122 = vpop.xlane.xlu0 %1121
        %v1123 = vmul.f32 %v1122, %v772
        %v1124 = vsub.f32 %v1117, %v1123
        %v1125 = vmul.f32 %v1124, %v1124
        %v1126 = vsel %vm762, %v1125, 0.0
        %1127 = vadd.xlane.f32.xlu0 %v1126
        %v1128 = vpop.xlane.xlu0 %1127
        %v1129 = vmul.f32 %v1128, %v772
        %v1130 = vadd.f32 %v1129, 1e-12
        %v1131 = vrsqrt.pop %v1130
        %v1132 = vmul.f32 %v1131, %v1130
        %v1133 = vmul.f32 %v1132, %v1131
        %v1134 = vmul.f32 0.5, %v1133
        %v1135 = vsub.f32 1.5, %v1134
        %v1136 = vmul.f32 %v1131, %v1135
        %vm1137 = vweird.f32 %v1130
        %vm1138 = vweird.f32 %v1131
        %vm1139 = vmor %vm1137, %vm1138
        %v1140 = vsel %vm1139, %v1131, %v1136
        %v1141 = vmul.f32 %v1124, %v1140
        %v1143 = vperm.slane %v1118, 0
        %v1145 = vmul.f32 %v1141, %v1143
        %v1147 = vperm.slane %v1119, 0
        %v1149 = vadd.f32 %v1145, %v1147
        %s1150 = scalar_lea.vmem %s4, 32
        %v1151 = vld [vmem:[%s1150] sm:$0xff]
        %v1152 = vld [vmem:[%s1150 + $0x8] sm:$0xff]
        %v1153 = vld [vmem:[%s1150 + $0x10] sm:$0xff]
        %v1154 = vld [vmem:[%s1150 + $0x18] sm:$0xff]
        %s1155 = scalar_lea.vmem %s5, 1
        %v1156 = vld [vmem:[%s1155] sm:$0x1]
        %v1158 = vperm.slane %v1156, 0
        %v1161 = vsel %vm762, %v1149, 0
        %1163 = vmatpush.msra.mxu0 0.0
        %1164 = vmatpush.msra.mxu0 0.0
        %1165 = vmatpush.msra.mxu0 0.0
        %1166 = vmatpush.msra.mxu0 0.0
        %1167 = vmatpush.msra.mxu0 0.0
        %1168 = vmatpush.msra.mxu0 0.0
        %1169 = vmatpush.msra.mxu0 0.0
        %1170 = vmatpush.msra.mxu0 0.0
        %1171 = vmatpush.msra.mxu0 0.0
        %1172 = vmatpush.msra.mxu0 0.0
        %1173 = vmatpush.msra.mxu0 0.0
        %1174 = vmatpush.msra.mxu0 0.0
        %1175 = vmatpush.msra.mxu0 %v1154
        %1176 = vmatpush.msra.mxu0 %v1153
        %1177 = vmatpush.msra.mxu0 %v1152
        %1178 = vmatpush.msra.mxu0 %v1151
        %1179 = vmatmul.f32.gmra.mxu0 %v1161
        %v1180 = vpop.f32.mrf.mxu0
        %v1181 = vadd.f32 %v1158, %v1180
        %1182 = vdwg.mxu0
        %1184 = vrot.lane.b32.xlu0 %v1181, 96
        %v1185 = vpop.permute.xlu0 %1184
        %v1186 = vsel %vm837, %v1181, 0
        %v1188 = vsel %vm837, %v1185, 0
        %1190 = vmatpush.xpose.msra.mxu0 0.0
        %1191 = vmatpush.xpose.msra.mxu0 0.0
        %1192 = vmatpush.xpose.msra.mxu0 0.0
        %1193 = vmatpush.xpose.msra.mxu0 0.0
        %1194 = vmatpush.xpose.msra.mxu0 0.0
        %1195 = vmatpush.xpose.msra.mxu0 0.0
        %1196 = vmatpush.xpose.msra.mxu0 0.0
        %1197 = vmatpush.xpose.msra.mxu0 0.0
        %1198 = vmatpush.xpose.msra.mxu0 0.0
        %1199 = vmatpush.xpose.msra.mxu0 0.0
        %1200 = vmatpush.xpose.msra.mxu0 0.0
        %1201 = vmatpush.xpose.msra.mxu0 0.0
        %1202 = vmatpush.xpose.msra.mxu0 0.0
        %1203 = vmatpush.xpose.msra.mxu0 0.0
        %1204 = vmatpush.xpose.msra.mxu0 0.0
        %1205 = vmatpush.xpose.msra.mxu0 %v1188
        %1206 = vmatmul.f32.gmra.mxu0 %v1186
        %v1207 = vpop.f32.mrf.mxu0
        %v1208 = vadd.f32 0.0, %v1207
        %1209 = vdwg.mxu0
        %v1210 = vmul.f32 %v1208, 0.25
        %v1211 = vadd.f32 %v1210, %v864
        %v1212 = vsel %vm867, %v1211, -inf
        %1213 = vmax.xlane.f32.xlu0 %v1212
        %v1214 = vpop.xlane.xlu0 %1213
        %v1215 = vsub.f32 %v1211, %v1214
        %v1216 = vmul.f32 %v1215, 1.442695
        %v1217 = vpow.pop %v1216
        %v1218 = vsel %vm867, %v1217, 0.0
        %1219 = vadd.xlane.f32.xlu0 %v1218
        %v1220 = vpop.xlane.xlu0 %1219
        %v1221 = vrcp.pop %v1220
        %v1222 = vmul.f32 %v1217, %v1221
        %1223 = vrot.lane.b32.xlu0 %v1181, 64
        %v1224 = vpop.permute.xlu0 %1223
        %v1227 = vsel %vm867, %v1222, 0
        %1229 = vmatpush.msra.mxu0 0.0
        %1230 = vmatpush.msra.mxu0 0.0
        %1231 = vmatpush.msra.mxu0 0.0
        %1232 = vmatpush.msra.mxu0 0.0
        %1233 = vmatpush.msra.mxu0 0.0
        %1234 = vmatpush.msra.mxu0 0.0
        %1235 = vmatpush.msra.mxu0 0.0
        %1236 = vmatpush.msra.mxu0 0.0
        %1237 = vmatpush.msra.mxu0 0.0
        %1238 = vmatpush.msra.mxu0 0.0
        %1239 = vmatpush.msra.mxu0 0.0
        %1240 = vmatpush.msra.mxu0 0.0
        %1241 = vmatpush.msra.mxu0 0.0
        %1242 = vmatpush.msra.mxu0 0.0
        %1243 = vmatpush.msra.mxu0 0.0
        %1244 = vmatpush.msra.mxu0 %v1224
        %1245 = vmatmul.f32.gmra.mxu0 %v1227
        %v1246 = vpop.f32.mrf.mxu0
        %v1247 = vadd.f32 0.0, %v1246
        %1248 = vdwg.mxu0
        %1249 = vrot.lane.b32.xlu0 %v1181, 112
        %v1250 = vpop.permute.xlu0 %1249
        %1251 = vrot.lane.b32.xlu0 %v1181, 80
        %v1252 = vpop.permute.xlu0 %1251
        %v1253 = vsel %vm837, %v1250, 0
        %v1255 = vsel %vm837, %v1252, 0
        %1257 = vmatpush.xpose.msra.mxu0 0.0
        %1258 = vmatpush.xpose.msra.mxu0 0.0
        %1259 = vmatpush.xpose.msra.mxu0 0.0
        %1260 = vmatpush.xpose.msra.mxu0 0.0
        %1261 = vmatpush.xpose.msra.mxu0 0.0
        %1262 = vmatpush.xpose.msra.mxu0 0.0
        %1263 = vmatpush.xpose.msra.mxu0 0.0
        %1264 = vmatpush.xpose.msra.mxu0 0.0
        %1265 = vmatpush.xpose.msra.mxu0 0.0
        %1266 = vmatpush.xpose.msra.mxu0 0.0
        %1267 = vmatpush.xpose.msra.mxu0 0.0
        %1268 = vmatpush.xpose.msra.mxu0 0.0
        %1269 = vmatpush.xpose.msra.mxu0 0.0
        %1270 = vmatpush.xpose.msra.mxu0 0.0
        %1271 = vmatpush.xpose.msra.mxu0 0.0
        %1272 = vmatpush.xpose.msra.mxu0 %v1255
        %1273 = vmatmul.f32.gmra.mxu0 %v1253
        %v1274 = vpop.f32.mrf.mxu0
        %v1275 = vadd.f32 0.0, %v1274
        %1276 = vdwg.mxu0
        %v1277 = vmul.f32 %v1275, 0.25
        %v1278 = vadd.f32 %v1277, %v864
        %v1279 = vsel %vm867, %v1278, -inf
        %1280 = vmax.xlane.f32.xlu0 %v1279
        %v1281 = vpop.xlane.xlu0 %1280
        %v1282 = vsub.f32 %v1278, %v1281
        %v1283 = vmul.f32 %v1282, 1.442695
        %v1284 = vpow.pop %v1283
        %v1285 = vsel %vm867, %v1284, 0.0
        %1286 = vadd.xlane.f32.xlu0 %v1285
        %v1287 = vpop.xlane.xlu0 %1286
        %v1288 = vrcp.pop %v1287
        %v1289 = vmul.f32 %v1284, %v1288
        %1290 = vrot.lane.b32.xlu0 %v1181, 48
        %v1291 = vpop.permute.xlu0 %1290
        %v1294 = vsel %vm867, %v1289, 0
        %1296 = vmatpush.msra.mxu0 0.0
        %1297 = vmatpush.msra.mxu0 0.0
        %1298 = vmatpush.msra.mxu0 0.0
        %1299 = vmatpush.msra.mxu0 0.0
        %1300 = vmatpush.msra.mxu0 0.0
        %1301 = vmatpush.msra.mxu0 0.0
        %1302 = vmatpush.msra.mxu0 0.0
        %1303 = vmatpush.msra.mxu0 0.0
        %1304 = vmatpush.msra.mxu0 0.0
        %1305 = vmatpush.msra.mxu0 0.0
        %1306 = vmatpush.msra.mxu0 0.0
        %1307 = vmatpush.msra.mxu0 0.0
        %1308 = vmatpush.msra.mxu0 0.0
        %1309 = vmatpush.msra.mxu0 0.0
        %1310 = vmatpush.msra.mxu0 0.0
        %1311 = vmatpush.msra.mxu0 %v1291
        %1312 = vmatmul.f32.gmra.mxu0 %v1294
        %v1313 = vpop.f32.mrf.mxu0
        %v1314 = vadd.f32 0.0, %v1313
        %1315 = vdwg.mxu0
        %1317 = vrot.lane.b32.xlu0 %v1314, 16
        %v1318 = vpop.permute.xlu0 %1317
        %v1320 = vsel %vm837, %v1247, %v1318
        %s1321 = scalar_lea.vmem %s6, 32
        %v1322 = vld [vmem:[%s1321] sm:$0xff]
        %v1323 = vld [vmem:[%s1321 + $0x8] sm:$0xff]
        %v1324 = vld [vmem:[%s1321 + $0x10] sm:$0xff]
        %v1325 = vld [vmem:[%s1321 + $0x18] sm:$0xff]
        %s1326 = scalar_lea.vmem %s7, 1
        %v1327 = vld [vmem:[%s1326] sm:$0x1]
        %v1329 = vperm.slane %v1327, 0
        %v1332 = vsel %vm762, %v1320, 0
        %1334 = vmatpush.msra.mxu0 0.0
        %1335 = vmatpush.msra.mxu0 0.0
        %1336 = vmatpush.msra.mxu0 0.0
        %1337 = vmatpush.msra.mxu0 0.0
        %1338 = vmatpush.msra.mxu0 0.0
        %1339 = vmatpush.msra.mxu0 0.0
        %1340 = vmatpush.msra.mxu0 0.0
        %1341 = vmatpush.msra.mxu0 0.0
        %1342 = vmatpush.msra.mxu0 0.0
        %1343 = vmatpush.msra.mxu0 0.0
        %1344 = vmatpush.msra.mxu0 0.0
        %1345 = vmatpush.msra.mxu0 0.0
        %1346 = vmatpush.msra.mxu0 %v1325
        %1347 = vmatpush.msra.mxu0 %v1324
        %1348 = vmatpush.msra.mxu0 %v1323
        %1349 = vmatpush.msra.mxu0 %v1322
        %1350 = vmatmul.f32.gmra.mxu0 %v1332
        %v1351 = vpop.f32.mrf.mxu0
        %v1352 = vadd.f32 %v1329, %v1351
        %1353 = vdwg.mxu0
        %v1354 = vadd.f32 %v1149, %v1352
        %s1355 = scalar_lea.vmem %s8, 1
        %v1356 = vld [vmem:[%s1355] sm:$0x1]
        %s1357 = scalar_lea.vmem %s9, 1
        %v1358 = vld [vmem:[%s1357] sm:$0x1]
        %v1359 = vsel %vm762, %v1354, 0.0
        %1360 = vadd.xlane.f32.xlu0 %v1359
        %v1361 = vpop.xlane.xlu0 %1360
        %v1362 = vmul.f32 %v1361, %v772
        %v1363 = vsub.f32 %v1354, %v1362
        %v1364 = vmul.f32 %v1363, %v1363
        %v1365 = vsel %vm762, %v1364, 0.0
        %1366 = vadd.xlane.f32.xlu0 %v1365
        %v1367 = vpop.xlane.xlu0 %1366
        %v1368 = vmul.f32 %v1367, %v772
        %v1369 = vadd.f32 %v1368, 1e-12
        %v1370 = vrsqrt.pop %v1369
        %v1371 = vmul.f32 %v1370, %v1369
        %v1372 = vmul.f32 %v1371, %v1370
        %v1373 = vmul.f32 0.5, %v1372
        %v1374 = vsub.f32 1.5, %v1373
        %v1375 = vmul.f32 %v1370, %v1374
        %vm1376 = vweird.f32 %v1369
        %vm1377 = vweird.f32 %v1370
        %vm1378 = vmor %vm1376, %vm1377
        %v1379 = vsel %vm1378, %v1370, %v1375
        %v1380 = vmul.f32 %v1363, %v1379
        %v1382 = vperm.slane %v1356, 0
        %v1384 = vmul.f32 %v1380, %v1382
        %v1386 = vperm.slane %v1358, 0
        %v1388 = vadd.f32 %v1384, %v1386
        %s1389 = scalar_lea.vmem %s10, 32
        %v1390 = vld [vmem:[%s1389] sm:$0xff]
        %v1391 = vld [vmem:[%s1389 + $0x8] sm:$0xff]
        %v1392 = vld [vmem:[%s1389 + $0x10] sm:$0xff]
        %v1393 = vld [vmem:[%s1389 + $0x18] sm:$0xff]
        %s1394 = scalar_lea.vmem %s11, 1
        %v1395 = vld [vmem:[%s1394] sm:$0x1]
        %v1397 = vperm.slane %v1395, 0
        %v1400 = vsel %vm762, %v1388, 0
        %1402 = vmatpush.msra.mxu0 0.0
        %1403 = vmatpush.msra.mxu0 0.0
        %1404 = vmatpush.msra.mxu0 0.0
        %1405 = vmatpush.msra.mxu0 0.0
        %1406 = vmatpush.msra.mxu0 0.0
        %1407 = vmatpush.msra.mxu0 0.0
        %1408 = vmatpush.msra.mxu0 0.0
        %1409 = vmatpush.msra.mxu0 0.0
        %1410 = vmatpush.msra.mxu0 0.0
        %1411 = vmatpush.msra.mxu0 0.0
        %1412 = vmatpush.msra.mxu0 0.0
        %1413 = vmatpush.msra.mxu0 0.0
        %1414 = vmatpush.msra.mxu0 %v1393
        %1415 = vmatpush.msra.mxu0 %v1392
        %1416 = vmatpush.msra.mxu0 %v1391
        %1417 = vmatpush.msra.mxu0 %v1390
        %1418 = vmatmul.f32.gmra.mxu0 %v1400
        %v1419 = vpop.f32.mrf.mxu0
        %v1420 = vadd.f32 %v1397, %v1419
        %1421 = vdwg.mxu0
        %v1422 = vmul.f32 %v1420, 0.5
        %v1423 = vmul.f32 %v1420, 0.044715
        %v1424 = vmul.f32 %v1423, %v1420
        %v1425 = vmul.f32 %v1424, %v1420
        %v1426 = vadd.f32 %v1420, %v1425
        %v1427 = vmul.f32 %v1426, 0.7978846
        %v1428 = vtanh.pop %v1427
        %v1429 = vadd.f32 %v1428, 1.0
        %v1430 = vmul.f32 %v1422, %v1429
        %s1431 = scalar_lea.vmem %s12, 64
        %v1432 = vld [vmem:[%s1431] sm:$0xff]
        %v1433 = vld [vmem:[%s1431 + $0x8] sm:$0xff]
        %v1434 = vld [vmem:[%s1431 + $0x10] sm:$0xff]
        %v1435 = vld [vmem:[%s1431 + $0x18] sm:$0xff]
        %v1436 = vld [vmem:[%s1431 + $0x20] sm:$0xff]
        %v1437 = vld [vmem:[%s1431 + $0x28] sm:$0xff]
        %v1438 = vld [vmem:[%s1431 + $0x30] sm:$0xff]
        %v1439 = vld [vmem:[%s1431 + $0x38] sm:$0xff]
        %s1440 = scalar_lea.vmem %s13, 1
        %v1441 = vld [vmem:[%s1440] sm:$0x1]
        %v1443 = vperm.slane %v1441, 0
        %v1446 = vsel %vm1093, %v1430, 0
        %1448 = vmatpush.msra.mxu0 0.0
        %1449 = vmatpush.msra.mxu0 0.0
        %1450 = vmatpush.msra.mxu0 0.0
        %1451 = vmatpush.msra.mxu0 0.0
        %1452 = vmatpush.msra.mxu0 0.0
        %1453 = vmatpush.msra.mxu0 0.0
        %1454 = vmatpush.msra.mxu0 0.0
        %1455 = vmatpush.msra.mxu0 0.0
        %1456 = vmatpush.msra.mxu0 %v1439
        %1457 = vmatpush.msra.mxu0 %v1438
        %1458 = vmatpush.msra.mxu0 %v1437
        %1459 = vmatpush.msra.mxu0 %v1436
        %1460 = vmatpush.msra.mxu0 %v1435
        %1461 = vmatpush.msra.mxu0 %v1434
        %1462 = vmatpush.msra.mxu0 %v1433
        %1463 = vmatpush.msra.mxu0 %v1432
        %1464 = vmatmul.f32.gmra.mxu0 %v1446
        %v1465 = vpop.f32.mrf.mxu0
        %v1466 = vadd.f32 %v1443, %v1465
        %1467 = vdwg.mxu0
        %v1468 = vadd.f32 %v1388, %v1466
        %s1469 = scalar_lea.vmem %s14, 1
        %v1470 = vld [vmem:[%s1469] sm:$0x1]
        %s1471 = scalar_lea.vmem %s15, 1
        %v1472 = vld [vmem:[%s1471] sm:$0x1]
        %v1473 = vsel %vm762, %v1468, 0.0
        %1474 = vadd.xlane.f32.xlu0 %v1473
        %v1475 = vpop.xlane.xlu0 %1474
        %v1476 = vmul.f32 %v1475, %v772
        %v1477 = vsub.f32 %v1468, %v1476
        %v1478 = vmul.f32 %v1477, %v1477
        %v1479 = vsel %vm762, %v1478, 0.0
        %1480 = vadd.xlane.f32.xlu0 %v1479
        %v1481 = vpop.xlane.xlu0 %1480
        %v1482 = vmul.f32 %v1481, %v772
        %v1483 = vadd.f32 %v1482, 1e-12
        %v1484 = vrsqrt.pop %v1483
        %v1485 = vmul.f32 %v1484, %v1483
        %v1486 = vmul.f32 %v1485, %v1484
        %v1487 = vmul.f32 0.5, %v1486
        %v1488 = vsub.f32 1.5, %v1487
        %v1489 = vmul.f32 %v1484, %v1488
        %vm1490 = vweird.f32 %v1483
        %vm1491 = vweird.f32 %v1484
        %vm1492 = vmor %vm1490, %vm1491
        %v1493 = vsel %vm1492, %v1484, %v1489
        %v1494 = vmul.f32 %v1477, %v1493
        %v1496 = vperm.slane %v1470, 0
        %v1498 = vmul.f32 %v1494, %v1496
        %v1500 = vperm.slane %v1472, 0
        %v1502 = vadd.f32 %v1498, %v1500
        %v1503 = vld [vmem:[%s16] sm:$0xff]
        %v1504 = vld [vmem:[%s16 + $0x8] sm:$0xff]
        %v1505 = vld [vmem:[%s16 + $0x10] sm:$0xff]
        %v1506 = vld [vmem:[%s16 + $0x18] sm:$0xff]
        %v1507 = vld [vmem:[%s17] sm:$0x1]
        %v1509 = vperm.slane %v1507, 0
        %v1512 = vsel %vm762, %v1502, 0
        %1514 = vmatpush.msra.mxu0 0.0
        %1515 = vmatpush.msra.mxu0 0.0
        %1516 = vmatpush.msra.mxu0 0.0
        %1517 = vmatpush.msra.mxu0 0.0
        %1518 = vmatpush.msra.mxu0 0.0
        %1519 = vmatpush.msra.mxu0 0.0
        %1520 = vmatpush.msra.mxu0 0.0
        %1521 = vmatpush.msra.mxu0 0.0
        %1522 = vmatpush.msra.mxu0 0.0
        %1523 = vmatpush.msra.mxu0 0.0
        %1524 = vmatpush.msra.mxu0 0.0
        %1525 = vmatpush.msra.mxu0 0.0
        %1526 = vmatpush.msra.mxu0 %v1506
        %1527 = vmatpush.msra.mxu0 %v1505
        %1528 = vmatpush.msra.mxu0 %v1504
        %1529 = vmatpush.msra.mxu0 %v1503
        %1530 = vmatmul.f32.gmra.mxu0 %v1512
        %v1531 = vpop.f32.mrf.mxu0
        %v1532 = vadd.f32 %v1509, %v1531
        %1533 = vdwg.mxu0
        %vm1534 = vcmask 15360
        %1535 = vst.msk [vmem:[%s758] sm:$0xff] %vm1534, %v1532
        %v1536 = vld [vmem:[%s18] sm:$0xff]
        %v1537 = vld [vmem:[%s18 + $0x8] sm:$0xff]
        %v1538 = vld [vmem:[%s18 + $0x10] sm:$0xff]
        %v1539 = vld [vmem:[%s18 + $0x18] sm:$0xff]
        %1540 = vmatpush.msra.mxu0 0.0
        %1541 = vmatpush.msra.mxu0 0.0
        %1542 = vmatpush.msra.mxu0 0.0
        %1543 = vmatpush.msra.mxu0 0.0
        %1544 = vmatpush.msra.mxu0 0.0
        %1545 = vmatpush.msra.mxu0 0.0
        %1546 = vmatpush.msra.mxu0 0.0
        %1547 = vmatpush.msra.mxu0 0.0
        %1548 = vmatpush.msra.mxu0 0.0
        %1549 = vmatpush.msra.mxu0 0.0
        %1550 = vmatpush.msra.mxu0 0.0
        %1551 = vmatpush.msra.mxu0 0.0
        %1552 = vmatpush.msra.mxu0 %v1539
        %1553 = vmatpush.msra.mxu0 %v1538
        %1554 = vmatpush.msra.mxu0 %v1537
        %1555 = vmatpush.msra.mxu0 %v1536
        %1556 = vmatmul.f32.gmra.mxu0 %v1512
        %v1557 = vpop.f32.mrf.mxu0
        %v1558 = vadd.f32 0.0, %v1557
        %1559 = vdwg.mxu0
        %v1560 = vld [vmem:[%s19] sm:$0xff]
        %v1561 = vld [vmem:[%s19 + $0x8] sm:$0xff]
        %v1562 = vld [vmem:[%s19 + $0x10] sm:$0xff]
        %v1563 = vld [vmem:[%s19 + $0x18] sm:$0xff]
        %1564 = vmatpush.msra.mxu0 0.0
        %1565 = vmatpush.msra.mxu0 0.0
        %1566 = vmatpush.msra.mxu0 0.0
        %1567 = vmatpush.msra.mxu0 0.0
        %1568 = vmatpush.msra.mxu0 0.0
        %1569 = vmatpush.msra.mxu0 0.0
        %1570 = vmatpush.msra.mxu0 0.0
        %1571 = vmatpush.msra.mxu0 0.0
        %1572 = vmatpush.msra.mxu0 0.0
        %1573 = vmatpush.msra.mxu0 0.0
        %1574 = vmatpush.msra.mxu0 0.0
        %1575 = vmatpush.msra.mxu0 0.0
        %1576 = vmatpush.msra.mxu0 %v1563
        %1577 = vmatpush.msra.mxu0 %v1562
        %1578 = vmatpush.msra.mxu0 %v1561
        %1579 = vmatpush.msra.mxu0 %v1560
        %1580 = vmatmul.f32.gmra.mxu0 %v1512
        %v1581 = vpop.f32.mrf.mxu0
        %v1582 = vadd.f32 0.0, %v1581
        %1583 = vdwg.mxu0
        %v1585 = vrot.slane %v1558, 1
        %v1586 = vrot.slane %v1558, 2
        %v1587 = vrot.slane %v1558, 3
        %v1588 = vrot.slane %v1558, 4
        %v1589 = vrot.slane %v1558, 5
        %v1590 = vrot.slane %v1558, 6
        %v1591 = vrot.slane %v1558, 7
        %v1592 = vperm.slane %v1558, 0
        %v1593 = vperm.slane %v1585, 0
        %v1594 = vperm.slane %v1586, 0
        %v1595 = vperm.slane %v1587, 0
        %v1596 = vperm.slane %v1588, 0
        %v1597 = vperm.slane %v1589, 0
        %v1598 = vperm.slane %v1590, 0
        %v1599 = vperm.slane %v1591, 0
        %v1608 = vadd.f32 %v1592, %v1582
        %v1609 = vadd.f32 %v1593, %v1582
        %v1610 = vadd.f32 %v1594, %v1582
        %v1611 = vadd.f32 %v1595, %v1582
        %v1612 = vadd.f32 %v1596, %v1582
        %v1613 = vadd.f32 %v1597, %v1582
        %v1614 = vadd.f32 %v1598, %v1582
        %v1615 = vadd.f32 %v1599, %v1582
        %v1616 = vld [vmem:[%s20] sm:$0x1]
        %v1618 = vperm.slane %v1616, 0
        %v1620 = vadd.f32 %v1608, %v1618
        %v1621 = vadd.f32 %v1609, %v1618
        %v1622 = vadd.f32 %v1610, %v1618
        %v1623 = vadd.f32 %v1611, %v1618
        %v1624 = vadd.f32 %v1612, %v1618
        %v1625 = vadd.f32 %v1613, %v1618
        %v1626 = vadd.f32 %v1614, %v1618
        %v1627 = vadd.f32 %v1615, %v1618
        %v1628 = vmul.f32 %v1620, 0.5
        %v1629 = vmul.f32 %v1621, 0.5
        %v1630 = vmul.f32 %v1622, 0.5
        %v1631 = vmul.f32 %v1623, 0.5
        %v1632 = vmul.f32 %v1624, 0.5
        %v1633 = vmul.f32 %v1625, 0.5
        %v1634 = vmul.f32 %v1626, 0.5
        %v1635 = vmul.f32 %v1627, 0.5
        %v1636 = vmul.f32 %v1620, 0.044715
        %v1637 = vmul.f32 %v1621, 0.044715
        %v1638 = vmul.f32 %v1622, 0.044715
        %v1639 = vmul.f32 %v1623, 0.044715
        %v1640 = vmul.f32 %v1624, 0.044715
        %v1641 = vmul.f32 %v1625, 0.044715
        %v1642 = vmul.f32 %v1626, 0.044715
        %v1643 = vmul.f32 %v1627, 0.044715
        %v1644 = vmul.f32 %v1636, %v1620
        %v1645 = vmul.f32 %v1637, %v1621
        %v1646 = vmul.f32 %v1638, %v1622
        %v1647 = vmul.f32 %v1639, %v1623
        %v1648 = vmul.f32 %v1640, %v1624
        %v1649 = vmul.f32 %v1641, %v1625
        %v1650 = vmul.f32 %v1642, %v1626
        %v1651 = vmul.f32 %v1643, %v1627
        %v1652 = vmul.f32 %v1644, %v1620
        %v1653 = vmul.f32 %v1645, %v1621
        %v1654 = vmul.f32 %v1646, %v1622
        %v1655 = vmul.f32 %v1647, %v1623
        %v1656 = vmul.f32 %v1648, %v1624
        %v1657 = vmul.f32 %v1649, %v1625
        %v1658 = vmul.f32 %v1650, %v1626
        %v1659 = vmul.f32 %v1651, %v1627
        %v1660 = vadd.f32 %v1620, %v1652
        %v1661 = vadd.f32 %v1621, %v1653
        %v1662 = vadd.f32 %v1622, %v1654
        %v1663 = vadd.f32 %v1623, %v1655
        %v1664 = vadd.f32 %v1624, %v1656
        %v1665 = vadd.f32 %v1625, %v1657
        %v1666 = vadd.f32 %v1626, %v1658
        %v1667 = vadd.f32 %v1627, %v1659
        %v1668 = vmul.f32 %v1660, 0.7978846
        %v1669 = vmul.f32 %v1661, 0.7978846
        %v1670 = vmul.f32 %v1662, 0.7978846
        %v1671 = vmul.f32 %v1663, 0.7978846
        %v1672 = vmul.f32 %v1664, 0.7978846
        %v1673 = vmul.f32 %v1665, 0.7978846
        %v1674 = vmul.f32 %v1666, 0.7978846
        %v1675 = vmul.f32 %v1667, 0.7978846
        %v1676 = vtanh.pop %v1668
        %v1677 = vtanh.pop %v1669
        %v1678 = vtanh.pop %v1670
        %v1679 = vtanh.pop %v1671
        %v1680 = vtanh.pop %v1672
        %v1681 = vtanh.pop %v1673
        %v1682 = vtanh.pop %v1674
        %v1683 = vtanh.pop %v1675
        %v1684 = vadd.f32 %v1676, 1.0
        %v1685 = vadd.f32 %v1677, 1.0
        %v1686 = vadd.f32 %v1678, 1.0
        %v1687 = vadd.f32 %v1679, 1.0
        %v1688 = vadd.f32 %v1680, 1.0
        %v1689 = vadd.f32 %v1681, 1.0
        %v1690 = vadd.f32 %v1682, 1.0
        %v1691 = vadd.f32 %v1683, 1.0
        %v1692 = vmul.f32 %v1628, %v1684
        %v1693 = vmul.f32 %v1629, %v1685
        %v1694 = vmul.f32 %v1630, %v1686
        %v1695 = vmul.f32 %v1631, %v1687
        %v1696 = vmul.f32 %v1632, %v1688
        %v1697 = vmul.f32 %v1633, %v1689
        %v1698 = vmul.f32 %v1634, %v1690
        %v1699 = vmul.f32 %v1635, %v1691
        %v1700 = vld [vmem:[%s21] sm:$0x1]
        %v1702 = vperm.slane %v1700, 0
        %v1704 = vmul.f32 %v1692, %v1702
        %v1705 = vmul.f32 %v1693, %v1702
        %v1706 = vmul.f32 %v1694, %v1702
        %v1707 = vmul.f32 %v1695, %v1702
        %v1708 = vmul.f32 %v1696, %v1702
        %v1709 = vmul.f32 %v1697, %v1702
        %v1710 = vmul.f32 %v1698, %v1702
        %v1711 = vmul.f32 %v1699, %v1702
        %v1712 = vsel %vm1093, %v1704, 0.0
        %1713 = vadd.xlane.f32.xlu0 %v1712
        %v1714 = vpop.xlane.xlu0 %1713
        %v1715 = vsel %vm1093, %v1705, 0.0
        %1716 = vadd.xlane.f32.xlu0 %v1715
        %v1717 = vpop.xlane.xlu0 %1716
        %v1718 = vsel %vm1093, %v1706, 0.0
        %1719 = vadd.xlane.f32.xlu0 %v1718
        %v1720 = vpop.xlane.xlu0 %1719
        %v1721 = vsel %vm1093, %v1707, 0.0
        %1722 = vadd.xlane.f32.xlu0 %v1721
        %v1723 = vpop.xlane.xlu0 %1722
        %v1724 = vsel %vm1093, %v1708, 0.0
        %1725 = vadd.xlane.f32.xlu0 %v1724
        %v1726 = vpop.xlane.xlu0 %1725
        %v1727 = vsel %vm1093, %v1709, 0.0
        %1728 = vadd.xlane.f32.xlu0 %v1727
        %v1729 = vpop.xlane.xlu0 %1728
        %v1730 = vsel %vm1093, %v1710, 0.0
        %1731 = vadd.xlane.f32.xlu0 %v1730
        %v1732 = vpop.xlane.xlu0 %1731
        %v1733 = vsel %vm1093, %v1711, 0.0
        %1734 = vadd.xlane.f32.xlu0 %v1733
        %v1735 = vpop.xlane.xlu0 %1734
        %s1736 = sld [smem:[#allocation2]]
        %v1737 = vstv %s1736
        %v1738 = vadd.f32 %v1714, %v1737
        %v1739 = vadd.f32 %v1717, %v1737
        %v1740 = vadd.f32 %v1720, %v1737
        %v1741 = vadd.f32 %v1723, %v1737
        %v1742 = vadd.f32 %v1726, %v1737
        %v1743 = vadd.f32 %v1729, %v1737
        %v1744 = vadd.f32 %v1732, %v1737
        %v1745 = vadd.f32 %v1735, %v1737
        %v1754 = vlaneseq
        %v1755 = vand.u32 %v1754, 127
        %v1756 = vperm.slane %v1738, %v1755
        %v1757 = vperm.slane %v1739, %v1755
        %v1758 = vperm.slane %v1740, %v1755
        %v1759 = vperm.slane %v1741, %v1755
        %v1760 = vperm.slane %v1742, %v1755
        %v1761 = vperm.slane %v1743, %v1755
        %v1762 = vperm.slane %v1744, %v1755
        %v1763 = vperm.slane %v1745, %v1755
        %vm1764 = vcmask 1041409
        %v1765 = vsel %vm1764, %v1757, %v1756
        %vm1766 = vcmask 1042434
        %v1767 = vsel %vm1766, %v1758, %v1765
        %vm1768 = vcmask 1043459
        %v1769 = vsel %vm1768, %v1759, %v1767
        %vm1770 = vcmask 1044484
        %v1771 = vsel %vm1770, %v1760, %v1769
        %vm1772 = vcmask 1045509
        %v1773 = vsel %vm1772, %v1761, %v1771
        %vm1774 = vcmask 1046534
        %v1775 = vsel %vm1774, %v1762, %v1773
        %vm1776 = vcmask 1047559
        %v1777 = vsel %vm1776, %v1763, %v1775
        %1779 = vst.msk [vmem:[%s741] sm:$0xff] %vm867, %v1777
        %s1780 = sand.u32 %s541, 1
        %s1781 = scalar_lea.sflag [#allocation4], %s1780
        %s1782 = sand.u32 %s541, 1
        %s1783 = smul.addr %s1782, 8
        %s1784 = scalar_lea.vmem [#allocation3], %s1783
        %p1785 = scmp.lt.s32.totalorder %s40, 1
        %s1786 = scalar_select %p1785, %s40, 1
        %s1787 = smul.addr %s1786, 8
        %s1788 = scalar_lea.vmem %s24, %s1787
        // Predicated region
        $region113: #{mrc_forward_pallas.1} parent=111 // pred_check
          %p1789 = pneg %p551
        $region114: #{mrc_forward_pallas.1} parent=111 // pred_check_branch
          %1791 = sbr.rel (%p1789) target = $region116
        $region115: #{mrc_forward_pallas.1} parent=111 // pred_region
          %1793 = vsyncadd %s1781, 0
          %s1794 = smul.addr %s40, 8
          %s1795 = scalar_lea.hbm %s23, %s1794
          %s1797 = sshll.u32 %s1784, 4
          %s1798 = int_to_ptr.vmem [resolvable:$true] %s1797
          %s1799 = sshll.u32 %s1795, 4
          %s1800 = int_to_ptr.hbm [resolvable:$true] %s1799
          %1802 = dma.vmem_to_hbm [thread:$0]  %s1798, 128, %s1800, %s1781
        $region116: #{mrc_forward_pallas.1} parent=111 // pred_fallthru
          _
        // Predicated region
        $region117: #{mrc_forward_pallas.1} parent=111 // pred_check
          %p1803 = pneg %p577
        $region118: #{mrc_forward_pallas.1} parent=111 // pred_check_branch
          %1805 = sbr.rel (%p1803) target = $region120
        $region119: #{mrc_forward_pallas.1} parent=111 // pred_region
          _
        $region120: #{mrc_forward_pallas.1} parent=111 // pred_fallthru
          _
      $region112: #{mrc_forward_pallas.1} parent=5 // pred_fallthru
        _
      %p1806 = scmp.le.s32.totalorder 2, %s35
      // Predicated region
      $region121: #{mrc_forward_pallas.1} parent=5 // pred_check
        %p1807 = pneg %p1806
      $region122: #{mrc_forward_pallas.1} parent=5 // pred_check_branch
        %1809 = sbr.rel (%p1807) target = $region124
      $region123: #{mrc_forward_pallas.1} parent=5 // pred_region
        %s1810 = ssub.s32 %s35, 2
        // Predicated region
        $region125: #{mrc_forward_pallas.1} parent=123 // pred_check
          %p1811 = pneg %p557
        $region126: #{mrc_forward_pallas.1} parent=123 // pred_check_branch
          %1813 = sbr.rel (%p1811) target = $region128
        $region127: #{mrc_forward_pallas.1} parent=123 // pred_region
          %s1814 = sand.u32 %s542, 1
          %s1815 = scalar_lea.sflag [#allocation4], %s1814
          %s1816 = sand.u32 %s542, 1
          %s1817 = smul.addr %s1816, 8
          %s1818 = scalar_lea.vmem [#allocation3], %s1817
          %1820 = dma.done %s1815, 128
        $region128: #{mrc_forward_pallas.1} parent=123 // pred_fallthru
          _
        // Predicated region
        $region129: #{mrc_forward_pallas.1} parent=123 // pred_check
          %p1821 = pneg %p583
        $region130: #{mrc_forward_pallas.1} parent=123 // pred_check_branch
          %1823 = sbr.rel (%p1821) target = $region132
        $region131: #{mrc_forward_pallas.1} parent=123 // pred_region
          %p1824 = scmp.lt.s32.totalorder %s41, 1
          %s1825 = scalar_select %p1824, %s41, 1
          %s1826 = smul.addr %s1825, 8
          %s1827 = scalar_lea.vmem %s24, %s1826
        $region132: #{mrc_forward_pallas.1} parent=123 // pred_fallthru
          _
      $region124: #{mrc_forward_pallas.1} parent=5 // pred_fallthru
        _
    $region6: #{mrc_forward_pallas.1} parent=1 // loop_footer
      %s39 = sadd.s32 1, %s35
    $region7: #{mrc_forward_pallas.1} parent=1 // loop_footer_branch
      %34 = sbr.rel target = $region3
    $region8: #{mrc_forward_pallas.1} parent=1 // loop_exit
      _
    %1828 = vsyncpa [#allocation4], 1
    %s1829 = scalar_lea.sflag [#allocation4], 1
    %1830 = vsyncpa %s1829, 1

</llo_original>
